<compile_context>
chip_gen: v7x
topology: tpu7x:2x2x1
jax: 0.10.0
libtpu: 0.0.40
codegen_flags: <defaults>
</compile_context>

<pallas_src>
import functools

import numpy as np

import jax
import jax.numpy as jnp
from jax.experimental import pallas as pl
from jax.experimental.pallas import tpu as pltpu


# ---------------------------------------------------------------------------
# Fixed geometry implied by the PyTorch module (28x28 input, Linear(200, 10))
# ---------------------------------------------------------------------------
C_IN = 1
H_IN, W_IN = 28, 28
C1, K1, S1 = 4, 5, 2
C2, K2, S2 = 8, 3, 2
H1 = (H_IN - K1) // S1 + 1          # 12
W1 = (W_IN - K1) // S1 + 1          # 12
H2 = (H1 - K2) // S2 + 1            # 5
W2 = (W1 - K2) // S2 + 1            # 5
N_OUT = 10
N_OUT_PAD = 128                     # lane-dense output block; sliced to 10 in wrapper


# ---------------------------------------------------------------------------
# One-time host-side weight folding (outside the hot path)
# ---------------------------------------------------------------------------
def _fold_conv_weight(w, w_in, w_out, stride):
    """Fold width-tap gather + width stride + conv weight into a single matrix.

    Returns M of shape (k*w_in*c_in, w_out*c_out) with
      M[p*w_in*c_in + w*c_in + c, j*c_out + o] = w[o, c, p, w - stride*j]
    (zero where the tap does not exist), so a height-tap-concatenated activation
    row (K layout p-major, then w, then c) times M is exactly the VALID strided
    conv output row (lane layout j-major, then o)."""
    w = np.asarray(w, np.float32)
    c_out, c_in, k, _ = w.shape
    m = np.zeros((k, w_in, c_in, w_out, c_out), np.float32)
    for p in range(k):
        for j in range(w_out):
            for q in range(k):
                m[p, stride * j + q, :, j, :] = w[:, :, p, q].T
    return m.reshape(k * w_in * c_in, w_out * c_out)


def prepare_fused_params(params):
    """Fold every weight once.  Each conv / the Linear becomes ONE matmul:
       conv1: (TB*12, 140) @ (140, 48)
       conv2: (TB*5, 144)  @ (144, 40)
       linear:(TB, 200)    @ (200, 128)   (10 real cols + 118 zero pad)
    Matmul operands are stored bf16 (f32 accumulation in-kernel); biases f32."""
    m1 = _fold_conv_weight(params["w1"], W_IN, W1, S1)          # (140, 48)
    m2 = _fold_conv_weight(params["w2"], W1, W2, S2)            # (144, 40)

    # Linear: fold PyTorch's (C,H,W)-major reshape(-1, 200) into the weight.
    # Our flattened activation feature order is h*40 + w*8 + c.
    wl = np.asarray(params["wl"], np.float32)                   # (10, 200)
    wl4 = wl.reshape(N_OUT, C2, H2, W2)                         # (out, c, h, w)
    wlf = wl4.transpose(2, 3, 1, 0).reshape(H2 * W2 * C2, N_OUT)  # (200, 10)
    wl_pad = np.zeros((H2 * W2 * C2, N_OUT_PAD), np.float32)
    wl_pad[:, :N_OUT] = wlf
    bl_pad = np.zeros((1, N_OUT_PAD), np.float32)
    bl_pad[0, :N_OUT] = np.asarray(params["bl"], np.float32)

    return {
        "m1": jnp.asarray(m1, jnp.bfloat16),
        "b1": jnp.asarray(np.tile(np.asarray(params["b1"], np.float32), W1)[None, :]),
        "m2": jnp.asarray(m2, jnp.bfloat16),
        "b2": jnp.asarray(np.tile(np.asarray(params["b2"], np.float32), W2)[None, :]),
        "wl": jnp.asarray(wl_pad, jnp.bfloat16),
        "bl": jnp.asarray(bl_pad),
    }


# ---------------------------------------------------------------------------
# The fused kernel (one grid step = one batch tile of TB samples)
# ---------------------------------------------------------------------------
def _fused_cnn_kernel(x_ref, m1_ref, b1_ref, m2_ref, b2_ref, wl_ref, bl_ref,
                      out_ref):
    tb = out_ref.shape[0]                       # batch-tile size
    bf16, f32 = jnp.bfloat16, jnp.float32

    # ---- conv1 (5x5 / stride 2) + ReLU : ONE matmul, K = 5*28 = 140 --------
    # Activation row layout everywhere: row = h_out * tb + n   (height-major).
    # K layout: p*(W*C) + w*C + c, matching the folded weight m1.
    tap_cols = []
    for p in range(K1):                         # static unroll over height taps
        col = jnp.concatenate([x_ref[S1 * i + p] for i in range(H1)], axis=0)
        tap_cols.append(col)                    # (tb*12, 28)
    act1 = jnp.concatenate(tap_cols, axis=-1).astype(bf16)          # (tb*12, 140)
    h1 = jnp.dot(act1, m1_ref[...], preferred_element_type=f32)
    h1 = jnp.maximum(h1 + b1_ref[...], 0.0)                         # (tb*12, 48)

    # ---- conv2 (3x3 / stride 2) + ReLU : ONE matmul, K = 3*48 = 144 --------
    tap_cols = []
    for p in range(K2):
        col = jnp.concatenate(
            [h1[(S2 * j + p) * tb:(S2 * j + p + 1) * tb, :] for j in range(H2)],
            axis=0)
        tap_cols.append(col)                    # (tb*5, 48)
    act2 = jnp.concatenate(tap_cols, axis=-1).astype(bf16)          # (tb*5, 144)
    h2 = jnp.dot(act2, m2_ref[...], preferred_element_type=f32)
    h2 = jnp.maximum(h2 + b2_ref[...], 0.0)                         # (tb*5, 40)

    # ---- flatten (PyTorch (C,H,W)-major order folded into wl) + Linear -----
    lin = jnp.concatenate([h2[h * tb:(h + 1) * tb, :] for h in range(H2)],
                          axis=-1).astype(bf16)                     # (tb, 200)
    out = jnp.dot(lin, wl_ref[...], preferred_element_type=f32) + bl_ref[...]
    out_ref[...] = out.astype(out_ref.dtype)                        # (tb, 128)


def _resident_spec(shape):
    # Full-array block at a constant block index -> DMA'd once, stays in VMEM.
    nd = len(shape)
    return pl.BlockSpec(shape, lambda b, _nd=nd: (0,) * _nd)


@functools.partial(jax.jit, static_argnames=("batch_tile",))
def simple_cnn_forward(x_nchw, fused, batch_tile=8):
    n, c, h, w = x_nchw.shape
    assert (c, h, w) == (C_IN, H_IN, W_IN)
    tb = batch_tile                              # multiple of 8 (sublane-aligned rows)
    n_pad = pl.cdiv(n, tb) * tb
    grid = (n_pad // tb,)

    # Internal layout: (H, N, W*C) so in-kernel height taps are aligned row reads.
    # This is ONE cheap relayout of the input outside the kernel; all
    # intermediates stay in VMEM/vregs inside the single pallas_call.
    x_hnwc = jnp.transpose(x_nchw, (2, 0, 3, 1)).reshape(h, n, w * c)
    if n_pad != n:
        x_hnwc = jnp.pad(x_hnwc, ((0, 0), (0, n_pad - n), (0, 0)))

    out = pl.pallas_call(
        _fused_cnn_kernel,
        out_shape=jax.ShapeDtypeStruct((n_pad, N_OUT_PAD), jnp.float32),
        grid=grid,
        in_specs=[
            pl.BlockSpec((H_IN, tb, W_IN * C_IN), lambda b: (0, b, 0)),
            _resident_spec(fused["m1"].shape),
            _resident_spec(fused["b1"].shape),
            _resident_spec(fused["m2"].shape),
            _resident_spec(fused["b2"].shape),
            _resident_spec(fused["wl"].shape),
            _resident_spec(fused["bl"].shape),
        ],
        out_specs=pl.BlockSpec((tb, N_OUT_PAD), lambda b: (b, 0)),
        compiler_params=pltpu.CompilerParams(
            dimension_semantics=("parallel",),      # megacore sharding on v7x
            vmem_limit_bytes=32 * 1024 * 1024,
        ),
    )(x_hnwc, fused["m1"], fused["b1"], fused["m2"], fused["b2"],
      fused["wl"], fused["bl"])

    return out[:n, :N_OUT]


# ---------------------------------------------------------------------------
# Params + pure-JAX reference (in-script correctness check)
# ---------------------------------------------------------------------------
def init_params(key, in_channel=1):
    k1, k2, k3, k4, k5, k6 = jax.random.split(key, 6)

    def u(k, shape, fan_in):
        bound = 1.0 / jnp.sqrt(fan_in)
        return jax.random.uniform(k, shape, jnp.float32, -bound, bound)

    return {
        "w1": u(k1, (C1, in_channel, K1, K1), in_channel * K1 * K1),
        "b1": u(k2, (C1,), in_channel * K1 * K1),
        "w2": u(k3, (C2, C1, K2, K2), C1 * K2 * K2),
        "b2": u(k4, (C2,), C1 * K2 * K2),
        "wl": u(k5, (N_OUT, C2 * H2 * W2), C2 * H2 * W2),   # PyTorch (out, in)
        "bl": u(k6, (N_OUT,), C2 * H2 * W2),
    }


def reference_forward(x, params):
    dn = ("NCHW", "OIHW", "NCHW")
    hp = jax.lax.Precision.HIGHEST
    y = jax.lax.conv_general_dilated(x, params["w1"], (S1, S1), "VALID",
                                     dimension_numbers=dn, precision=hp)
    y = jnp.maximum(y + params["b1"].reshape(1, -1, 1, 1), 0.0)
    y = jax.lax.conv_general_dilated(y, params["w2"], (S2, S2), "VALID",
                                     dimension_numbers=dn, precision=hp)
    y = jnp.maximum(y + params["b2"].reshape(1, -1, 1, 1), 0.0)
    y = y.reshape(-1, C2 * H2 * W2)
    return jnp.dot(y, params["wl"].T, precision=hp) + params["bl"]


if __name__ == "__main__":
    key = jax.random.PRNGKey(0)
    k_x, k_p = jax.random.split(key)

    # Small demo batch that still exercises a 2-step batch grid (TB = 8).
    n = 16
    x = jax.random.normal(k_x, (n, C_IN, H_IN, W_IN), jnp.float32)
    params = init_params(k_p, in_channel=C_IN)

    fused = prepare_fused_params(params)          # one-time folding, off hot path

    out = simple_cnn_forward(x, fused, batch_tile=8)
    out = jax.block_until_ready(out)
    assert out.shape == (n, N_OUT) and out.dtype == jnp.float32

    ref = reference_forward(x, params)
    err = float(jnp.max(jnp.abs(out - ref)))
    # bf16 matmul operands (f32 accumulation) vs. an all-f32 reference:
    # expected agreement ~1e-3; assert with comfortable margin.
    assert jnp.allclose(out, ref, atol=2e-2, rtol=2e-2), f"max abs diff {err}"

    print("KERNEL_OK")
</pallas_src>

<mosaic_0001>
module attributes {stable_mosaic.version = 11 : i64} {
  func.func @_fused_cnn_kernel(%arg0: i32, %arg1: memref<28x8x28xf32, #tpu.memory_space<vmem>>, %arg2: memref<140x48xbf16, #tpu.memory_space<vmem>>, %arg3: memref<1x48xf32, #tpu.memory_space<vmem>>, %arg4: memref<144x40xbf16, #tpu.memory_space<vmem>>, %arg5: memref<1x40xf32, #tpu.memory_space<vmem>>, %arg6: memref<200x128xbf16, #tpu.memory_space<vmem>>, %arg7: memref<1x128xf32, #tpu.memory_space<vmem>>, %arg8: memref<8x128xf32, #tpu.memory_space<vmem>>) attributes {dimension_semantics = [#tpu.dimension_semantics<parallel>], iteration_bounds = array<i64: 2>, scalar_prefetch = 0 : i64, scratch_operands = 0 : i64, tpu.core_type = #tpu.core_type<tc>, window_params = [{transform_indices = @transform_0, window_bounds = array<i64: 28, 8, 28>}, {pipeline_mode = #tpu.pipeline_mode<synchronous>, transform_indices = @transform_1, window_bounds = array<i64: 140, 48>}, {pipeline_mode = #tpu.pipeline_mode<synchronous>, transform_indices = @transform_2, window_bounds = array<i64: 1, 48>}, {pipeline_mode = #tpu.pipeline_mode<synchronous>, transform_indices = @transform_3, window_bounds = array<i64: 144, 40>}, {pipeline_mode = #tpu.pipeline_mode<synchronous>, transform_indices = @transform_4, window_bounds = array<i64: 1, 40>}, {pipeline_mode = #tpu.pipeline_mode<synchronous>, transform_indices = @transform_5, window_bounds = array<i64: 200, 128>}, {pipeline_mode = #tpu.pipeline_mode<synchronous>, transform_indices = @transform_6, window_bounds = array<i64: 1, 128>}, {transform_indices = @transform_7, window_bounds = array<i64: 8, 128>}]} {
    %c0 = arith.constant 0 : index
    %c0_0 = arith.constant 0 : index
    %c0_1 = arith.constant 0 : index
    %0 = vector.load %arg1[%c0, %c0_0, %c0_1] : memref<28x8x28xf32, #tpu.memory_space<vmem>>, vector<1x8x28xf32>
    %1 = vector.shape_cast %0 : vector<1x8x28xf32> to vector<8x28xf32>
    %c2 = arith.constant 2 : index
    %c0_2 = arith.constant 0 : index
    %c0_3 = arith.constant 0 : index
    %2 = vector.load %arg1[%c2, %c0_2, %c0_3] : memref<28x8x28xf32, #tpu.memory_space<vmem>>, vector<1x8x28xf32>
    %3 = vector.shape_cast %2 : vector<1x8x28xf32> to vector<8x28xf32>
    %c4 = arith.constant 4 : index
    %c0_4 = arith.constant 0 : index
    %c0_5 = arith.constant 0 : index
    %4 = vector.load %arg1[%c4, %c0_4, %c0_5] : memref<28x8x28xf32, #tpu.memory_space<vmem>>, vector<1x8x28xf32>
    %5 = vector.shape_cast %4 : vector<1x8x28xf32> to vector<8x28xf32>
    %c6 = arith.constant 6 : index
    %c0_6 = arith.constant 0 : index
    %c0_7 = arith.constant 0 : index
    %6 = vector.load %arg1[%c6, %c0_6, %c0_7] : memref<28x8x28xf32, #tpu.memory_space<vmem>>, vector<1x8x28xf32>
    %7 = vector.shape_cast %6 : vector<1x8x28xf32> to vector<8x28xf32>
    %c8 = arith.constant 8 : index
    %c0_8 = arith.constant 0 : index
    %c0_9 = arith.constant 0 : index
    %8 = vector.load %arg1[%c8, %c0_8, %c0_9] : memref<28x8x28xf32, #tpu.memory_space<vmem>>, vector<1x8x28xf32>
    %9 = vector.shape_cast %8 : vector<1x8x28xf32> to vector<8x28xf32>
    %c10 = arith.constant 10 : index
    %c0_10 = arith.constant 0 : index
    %c0_11 = arith.constant 0 : index
    %10 = vector.load %arg1[%c10, %c0_10, %c0_11] : memref<28x8x28xf32, #tpu.memory_space<vmem>>, vector<1x8x28xf32>
    %11 = vector.shape_cast %10 : vector<1x8x28xf32> to vector<8x28xf32>
    %c12 = arith.constant 12 : index
    %c0_12 = arith.constant 0 : index
    %c0_13 = arith.constant 0 : index
    %12 = vector.load %arg1[%c12, %c0_12, %c0_13] : memref<28x8x28xf32, #tpu.memory_space<vmem>>, vector<1x8x28xf32>
    %13 = vector.shape_cast %12 : vector<1x8x28xf32> to vector<8x28xf32>
    %c14 = arith.constant 14 : index
    %c0_14 = arith.constant 0 : index
    %c0_15 = arith.constant 0 : index
    %14 = vector.load %arg1[%c14, %c0_14, %c0_15] : memref<28x8x28xf32, #tpu.memory_space<vmem>>, vector<1x8x28xf32>
    %15 = vector.shape_cast %14 : vector<1x8x28xf32> to vector<8x28xf32>
    %c16 = arith.constant 16 : index
    %c0_16 = arith.constant 0 : index
    %c0_17 = arith.constant 0 : index
    %16 = vector.load %arg1[%c16, %c0_16, %c0_17] : memref<28x8x28xf32, #tpu.memory_space<vmem>>, vector<1x8x28xf32>
    %17 = vector.shape_cast %16 : vector<1x8x28xf32> to vector<8x28xf32>
    %c18 = arith.constant 18 : index
    %c0_18 = arith.constant 0 : index
    %c0_19 = arith.constant 0 : index
    %18 = vector.load %arg1[%c18, %c0_18, %c0_19] : memref<28x8x28xf32, #tpu.memory_space<vmem>>, vector<1x8x28xf32>
    %19 = vector.shape_cast %18 : vector<1x8x28xf32> to vector<8x28xf32>
    %c20 = arith.constant 20 : index
    %c0_20 = arith.constant 0 : index
    %c0_21 = arith.constant 0 : index
    %20 = vector.load %arg1[%c20, %c0_20, %c0_21] : memref<28x8x28xf32, #tpu.memory_space<vmem>>, vector<1x8x28xf32>
    %21 = vector.shape_cast %20 : vector<1x8x28xf32> to vector<8x28xf32>
    %c22 = arith.constant 22 : index
    %c0_22 = arith.constant 0 : index
    %c0_23 = arith.constant 0 : index
    %22 = vector.load %arg1[%c22, %c0_22, %c0_23] : memref<28x8x28xf32, #tpu.memory_space<vmem>>, vector<1x8x28xf32>
    %23 = vector.shape_cast %22 : vector<1x8x28xf32> to vector<8x28xf32>
    %24 = tpu.concatenate %1, %3, %5, %7, %9, %11, %13, %15, %17, %19, %21, %23 in 0 : vector<8x28xf32>, vector<8x28xf32>, vector<8x28xf32>, vector<8x28xf32>, vector<8x28xf32>, vector<8x28xf32>, vector<8x28xf32>, vector<8x28xf32>, vector<8x28xf32>, vector<8x28xf32>, vector<8x28xf32>, vector<8x28xf32> -> vector<96x28xf32>
    %c1 = arith.constant 1 : index
    %c0_24 = arith.constant 0 : index
    %c0_25 = arith.constant 0 : index
    %25 = vector.load %arg1[%c1, %c0_24, %c0_25] : memref<28x8x28xf32, #tpu.memory_space<vmem>>, vector<1x8x28xf32>
    %26 = vector.shape_cast %25 : vector<1x8x28xf32> to vector<8x28xf32>
    %c3 = arith.constant 3 : index
    %c0_26 = arith.constant 0 : index
    %c0_27 = arith.constant 0 : index
    %27 = vector.load %arg1[%c3, %c0_26, %c0_27] : memref<28x8x28xf32, #tpu.memory_space<vmem>>, vector<1x8x28xf32>
    %28 = vector.shape_cast %27 : vector<1x8x28xf32> to vector<8x28xf32>
    %c5 = arith.constant 5 : index
    %c0_28 = arith.constant 0 : index
    %c0_29 = arith.constant 0 : index
    %29 = vector.load %arg1[%c5, %c0_28, %c0_29] : memref<28x8x28xf32, #tpu.memory_space<vmem>>, vector<1x8x28xf32>
    %30 = vector.shape_cast %29 : vector<1x8x28xf32> to vector<8x28xf32>
    %c7 = arith.constant 7 : index
    %c0_30 = arith.constant 0 : index
    %c0_31 = arith.constant 0 : index
    %31 = vector.load %arg1[%c7, %c0_30, %c0_31] : memref<28x8x28xf32, #tpu.memory_space<vmem>>, vector<1x8x28xf32>
    %32 = vector.shape_cast %31 : vector<1x8x28xf32> to vector<8x28xf32>
    %c9 = arith.constant 9 : index
    %c0_32 = arith.constant 0 : index
    %c0_33 = arith.constant 0 : index
    %33 = vector.load %arg1[%c9, %c0_32, %c0_33] : memref<28x8x28xf32, #tpu.memory_space<vmem>>, vector<1x8x28xf32>
    %34 = vector.shape_cast %33 : vector<1x8x28xf32> to vector<8x28xf32>
    %c11 = arith.constant 11 : index
    %c0_34 = arith.constant 0 : index
    %c0_35 = arith.constant 0 : index
    %35 = vector.load %arg1[%c11, %c0_34, %c0_35] : memref<28x8x28xf32, #tpu.memory_space<vmem>>, vector<1x8x28xf32>
    %36 = vector.shape_cast %35 : vector<1x8x28xf32> to vector<8x28xf32>
    %c13 = arith.constant 13 : index
    %c0_36 = arith.constant 0 : index
    %c0_37 = arith.constant 0 : index
    %37 = vector.load %arg1[%c13, %c0_36, %c0_37] : memref<28x8x28xf32, #tpu.memory_space<vmem>>, vector<1x8x28xf32>
    %38 = vector.shape_cast %37 : vector<1x8x28xf32> to vector<8x28xf32>
    %c15 = arith.constant 15 : index
    %c0_38 = arith.constant 0 : index
    %c0_39 = arith.constant 0 : index
    %39 = vector.load %arg1[%c15, %c0_38, %c0_39] : memref<28x8x28xf32, #tpu.memory_space<vmem>>, vector<1x8x28xf32>
    %40 = vector.shape_cast %39 : vector<1x8x28xf32> to vector<8x28xf32>
    %c17 = arith.constant 17 : index
    %c0_40 = arith.constant 0 : index
    %c0_41 = arith.constant 0 : index
    %41 = vector.load %arg1[%c17, %c0_40, %c0_41] : memref<28x8x28xf32, #tpu.memory_space<vmem>>, vector<1x8x28xf32>
    %42 = vector.shape_cast %41 : vector<1x8x28xf32> to vector<8x28xf32>
    %c19 = arith.constant 19 : index
    %c0_42 = arith.constant 0 : index
    %c0_43 = arith.constant 0 : index
    %43 = vector.load %arg1[%c19, %c0_42, %c0_43] : memref<28x8x28xf32, #tpu.memory_space<vmem>>, vector<1x8x28xf32>
    %44 = vector.shape_cast %43 : vector<1x8x28xf32> to vector<8x28xf32>
    %c21 = arith.constant 21 : index
    %c0_44 = arith.constant 0 : index
    %c0_45 = arith.constant 0 : index
    %45 = vector.load %arg1[%c21, %c0_44, %c0_45] : memref<28x8x28xf32, #tpu.memory_space<vmem>>, vector<1x8x28xf32>
    %46 = vector.shape_cast %45 : vector<1x8x28xf32> to vector<8x28xf32>
    %c23 = arith.constant 23 : index
    %c0_46 = arith.constant 0 : index
    %c0_47 = arith.constant 0 : index
    %47 = vector.load %arg1[%c23, %c0_46, %c0_47] : memref<28x8x28xf32, #tpu.memory_space<vmem>>, vector<1x8x28xf32>
    %48 = vector.shape_cast %47 : vector<1x8x28xf32> to vector<8x28xf32>
    %49 = tpu.concatenate %26, %28, %30, %32, %34, %36, %38, %40, %42, %44, %46, %48 in 0 : vector<8x28xf32>, vector<8x28xf32>, vector<8x28xf32>, vector<8x28xf32>, vector<8x28xf32>, vector<8x28xf32>, vector<8x28xf32>, vector<8x28xf32>, vector<8x28xf32>, vector<8x28xf32>, vector<8x28xf32>, vector<8x28xf32> -> vector<96x28xf32>
    %c2_48 = arith.constant 2 : index
    %c0_49 = arith.constant 0 : index
    %c0_50 = arith.constant 0 : index
    %50 = vector.load %arg1[%c2_48, %c0_49, %c0_50] : memref<28x8x28xf32, #tpu.memory_space<vmem>>, vector<1x8x28xf32>
    %51 = vector.shape_cast %50 : vector<1x8x28xf32> to vector<8x28xf32>
    %c4_51 = arith.constant 4 : index
    %c0_52 = arith.constant 0 : index
    %c0_53 = arith.constant 0 : index
    %52 = vector.load %arg1[%c4_51, %c0_52, %c0_53] : memref<28x8x28xf32, #tpu.memory_space<vmem>>, vector<1x8x28xf32>
    %53 = vector.shape_cast %52 : vector<1x8x28xf32> to vector<8x28xf32>
    %c6_54 = arith.constant 6 : index
    %c0_55 = arith.constant 0 : index
    %c0_56 = arith.constant 0 : index
    %54 = vector.load %arg1[%c6_54, %c0_55, %c0_56] : memref<28x8x28xf32, #tpu.memory_space<vmem>>, vector<1x8x28xf32>
    %55 = vector.shape_cast %54 : vector<1x8x28xf32> to vector<8x28xf32>
    %c8_57 = arith.constant 8 : index
    %c0_58 = arith.constant 0 : index
    %c0_59 = arith.constant 0 : index
    %56 = vector.load %arg1[%c8_57, %c0_58, %c0_59] : memref<28x8x28xf32, #tpu.memory_space<vmem>>, vector<1x8x28xf32>
    %57 = vector.shape_cast %56 : vector<1x8x28xf32> to vector<8x28xf32>
    %c10_60 = arith.constant 10 : index
    %c0_61 = arith.constant 0 : index
    %c0_62 = arith.constant 0 : index
    %58 = vector.load %arg1[%c10_60, %c0_61, %c0_62] : memref<28x8x28xf32, #tpu.memory_space<vmem>>, vector<1x8x28xf32>
    %59 = vector.shape_cast %58 : vector<1x8x28xf32> to vector<8x28xf32>
    %c12_63 = arith.constant 12 : index
    %c0_64 = arith.constant 0 : index
    %c0_65 = arith.constant 0 : index
    %60 = vector.load %arg1[%c12_63, %c0_64, %c0_65] : memref<28x8x28xf32, #tpu.memory_space<vmem>>, vector<1x8x28xf32>
    %61 = vector.shape_cast %60 : vector<1x8x28xf32> to vector<8x28xf32>
    %c14_66 = arith.constant 14 : index
    %c0_67 = arith.constant 0 : index
    %c0_68 = arith.constant 0 : index
    %62 = vector.load %arg1[%c14_66, %c0_67, %c0_68] : memref<28x8x28xf32, #tpu.memory_space<vmem>>, vector<1x8x28xf32>
    %63 = vector.shape_cast %62 : vector<1x8x28xf32> to vector<8x28xf32>
    %c16_69 = arith.constant 16 : index
    %c0_70 = arith.constant 0 : index
    %c0_71 = arith.constant 0 : index
    %64 = vector.load %arg1[%c16_69, %c0_70, %c0_71] : memref<28x8x28xf32, #tpu.memory_space<vmem>>, vector<1x8x28xf32>
    %65 = vector.shape_cast %64 : vector<1x8x28xf32> to vector<8x28xf32>
    %c18_72 = arith.constant 18 : index
    %c0_73 = arith.constant 0 : index
    %c0_74 = arith.constant 0 : index
    %66 = vector.load %arg1[%c18_72, %c0_73, %c0_74] : memref<28x8x28xf32, #tpu.memory_space<vmem>>, vector<1x8x28xf32>
    %67 = vector.shape_cast %66 : vector<1x8x28xf32> to vector<8x28xf32>
    %c20_75 = arith.constant 20 : index
    %c0_76 = arith.constant 0 : index
    %c0_77 = arith.constant 0 : index
    %68 = vector.load %arg1[%c20_75, %c0_76, %c0_77] : memref<28x8x28xf32, #tpu.memory_space<vmem>>, vector<1x8x28xf32>
    %69 = vector.shape_cast %68 : vector<1x8x28xf32> to vector<8x28xf32>
    %c22_78 = arith.constant 22 : index
    %c0_79 = arith.constant 0 : index
    %c0_80 = arith.constant 0 : index
    %70 = vector.load %arg1[%c22_78, %c0_79, %c0_80] : memref<28x8x28xf32, #tpu.memory_space<vmem>>, vector<1x8x28xf32>
    %71 = vector.shape_cast %70 : vector<1x8x28xf32> to vector<8x28xf32>
    %c24 = arith.constant 24 : index
    %c0_81 = arith.constant 0 : index
    %c0_82 = arith.constant 0 : index
    %72 = vector.load %arg1[%c24, %c0_81, %c0_82] : memref<28x8x28xf32, #tpu.memory_space<vmem>>, vector<1x8x28xf32>
    %73 = vector.shape_cast %72 : vector<1x8x28xf32> to vector<8x28xf32>
    %74 = tpu.concatenate %51, %53, %55, %57, %59, %61, %63, %65, %67, %69, %71, %73 in 0 : vector<8x28xf32>, vector<8x28xf32>, vector<8x28xf32>, vector<8x28xf32>, vector<8x28xf32>, vector<8x28xf32>, vector<8x28xf32>, vector<8x28xf32>, vector<8x28xf32>, vector<8x28xf32>, vector<8x28xf32>, vector<8x28xf32> -> vector<96x28xf32>
    %c3_83 = arith.constant 3 : index
    %c0_84 = arith.constant 0 : index
    %c0_85 = arith.constant 0 : index
    %75 = vector.load %arg1[%c3_83, %c0_84, %c0_85] : memref<28x8x28xf32, #tpu.memory_space<vmem>>, vector<1x8x28xf32>
    %76 = vector.shape_cast %75 : vector<1x8x28xf32> to vector<8x28xf32>
    %c5_86 = arith.constant 5 : index
    %c0_87 = arith.constant 0 : index
    %c0_88 = arith.constant 0 : index
    %77 = vector.load %arg1[%c5_86, %c0_87, %c0_88] : memref<28x8x28xf32, #tpu.memory_space<vmem>>, vector<1x8x28xf32>
    %78 = vector.shape_cast %77 : vector<1x8x28xf32> to vector<8x28xf32>
    %c7_89 = arith.constant 7 : index
    %c0_90 = arith.constant 0 : index
    %c0_91 = arith.constant 0 : index
    %79 = vector.load %arg1[%c7_89, %c0_90, %c0_91] : memref<28x8x28xf32, #tpu.memory_space<vmem>>, vector<1x8x28xf32>
    %80 = vector.shape_cast %79 : vector<1x8x28xf32> to vector<8x28xf32>
    %c9_92 = arith.constant 9 : index
    %c0_93 = arith.constant 0 : index
    %c0_94 = arith.constant 0 : index
    %81 = vector.load %arg1[%c9_92, %c0_93, %c0_94] : memref<28x8x28xf32, #tpu.memory_space<vmem>>, vector<1x8x28xf32>
    %82 = vector.shape_cast %81 : vector<1x8x28xf32> to vector<8x28xf32>
    %c11_95 = arith.constant 11 : index
    %c0_96 = arith.constant 0 : index
    %c0_97 = arith.constant 0 : index
    %83 = vector.load %arg1[%c11_95, %c0_96, %c0_97] : memref<28x8x28xf32, #tpu.memory_space<vmem>>, vector<1x8x28xf32>
    %84 = vector.shape_cast %83 : vector<1x8x28xf32> to vector<8x28xf32>
    %c13_98 = arith.constant 13 : index
    %c0_99 = arith.constant 0 : index
    %c0_100 = arith.constant 0 : index
    %85 = vector.load %arg1[%c13_98, %c0_99, %c0_100] : memref<28x8x28xf32, #tpu.memory_space<vmem>>, vector<1x8x28xf32>
    %86 = vector.shape_cast %85 : vector<1x8x28xf32> to vector<8x28xf32>
    %c15_101 = arith.constant 15 : index
    %c0_102 = arith.constant 0 : index
    %c0_103 = arith.constant 0 : index
    %87 = vector.load %arg1[%c15_101, %c0_102, %c0_103] : memref<28x8x28xf32, #tpu.memory_space<vmem>>, vector<1x8x28xf32>
    %88 = vector.shape_cast %87 : vector<1x8x28xf32> to vector<8x28xf32>
    %c17_104 = arith.constant 17 : index
    %c0_105 = arith.constant 0 : index
    %c0_106 = arith.constant 0 : index
    %89 = vector.load %arg1[%c17_104, %c0_105, %c0_106] : memref<28x8x28xf32, #tpu.memory_space<vmem>>, vector<1x8x28xf32>
    %90 = vector.shape_cast %89 : vector<1x8x28xf32> to vector<8x28xf32>
    %c19_107 = arith.constant 19 : index
    %c0_108 = arith.constant 0 : index
    %c0_109 = arith.constant 0 : index
    %91 = vector.load %arg1[%c19_107, %c0_108, %c0_109] : memref<28x8x28xf32, #tpu.memory_space<vmem>>, vector<1x8x28xf32>
    %92 = vector.shape_cast %91 : vector<1x8x28xf32> to vector<8x28xf32>
    %c21_110 = arith.constant 21 : index
    %c0_111 = arith.constant 0 : index
    %c0_112 = arith.constant 0 : index
    %93 = vector.load %arg1[%c21_110, %c0_111, %c0_112] : memref<28x8x28xf32, #tpu.memory_space<vmem>>, vector<1x8x28xf32>
    %94 = vector.shape_cast %93 : vector<1x8x28xf32> to vector<8x28xf32>
    %c23_113 = arith.constant 23 : index
    %c0_114 = arith.constant 0 : index
    %c0_115 = arith.constant 0 : index
    %95 = vector.load %arg1[%c23_113, %c0_114, %c0_115] : memref<28x8x28xf32, #tpu.memory_space<vmem>>, vector<1x8x28xf32>
    %96 = vector.shape_cast %95 : vector<1x8x28xf32> to vector<8x28xf32>
    %c25 = arith.constant 25 : index
    %c0_116 = arith.constant 0 : index
    %c0_117 = arith.constant 0 : index
    %97 = vector.load %arg1[%c25, %c0_116, %c0_117] : memref<28x8x28xf32, #tpu.memory_space<vmem>>, vector<1x8x28xf32>
    %98 = vector.shape_cast %97 : vector<1x8x28xf32> to vector<8x28xf32>
    %99 = tpu.concatenate %76, %78, %80, %82, %84, %86, %88, %90, %92, %94, %96, %98 in 0 : vector<8x28xf32>, vector<8x28xf32>, vector<8x28xf32>, vector<8x28xf32>, vector<8x28xf32>, vector<8x28xf32>, vector<8x28xf32>, vector<8x28xf32>, vector<8x28xf32>, vector<8x28xf32>, vector<8x28xf32>, vector<8x28xf32> -> vector<96x28xf32>
    %c4_118 = arith.constant 4 : index
    %c0_119 = arith.constant 0 : index
    %c0_120 = arith.constant 0 : index
    %100 = vector.load %arg1[%c4_118, %c0_119, %c0_120] : memref<28x8x28xf32, #tpu.memory_space<vmem>>, vector<1x8x28xf32>
    %101 = vector.shape_cast %100 : vector<1x8x28xf32> to vector<8x28xf32>
    %c6_121 = arith.constant 6 : index
    %c0_122 = arith.constant 0 : index
    %c0_123 = arith.constant 0 : index
    %102 = vector.load %arg1[%c6_121, %c0_122, %c0_123] : memref<28x8x28xf32, #tpu.memory_space<vmem>>, vector<1x8x28xf32>
    %103 = vector.shape_cast %102 : vector<1x8x28xf32> to vector<8x28xf32>
    %c8_124 = arith.constant 8 : index
    %c0_125 = arith.constant 0 : index
    %c0_126 = arith.constant 0 : index
    %104 = vector.load %arg1[%c8_124, %c0_125, %c0_126] : memref<28x8x28xf32, #tpu.memory_space<vmem>>, vector<1x8x28xf32>
    %105 = vector.shape_cast %104 : vector<1x8x28xf32> to vector<8x28xf32>
    %c10_127 = arith.constant 10 : index
    %c0_128 = arith.constant 0 : index
    %c0_129 = arith.constant 0 : index
    %106 = vector.load %arg1[%c10_127, %c0_128, %c0_129] : memref<28x8x28xf32, #tpu.memory_space<vmem>>, vector<1x8x28xf32>
    %107 = vector.shape_cast %106 : vector<1x8x28xf32> to vector<8x28xf32>
    %c12_130 = arith.constant 12 : index
    %c0_131 = arith.constant 0 : index
    %c0_132 = arith.constant 0 : index
    %108 = vector.load %arg1[%c12_130, %c0_131, %c0_132] : memref<28x8x28xf32, #tpu.memory_space<vmem>>, vector<1x8x28xf32>
    %109 = vector.shape_cast %108 : vector<1x8x28xf32> to vector<8x28xf32>
    %c14_133 = arith.constant 14 : index
    %c0_134 = arith.constant 0 : index
    %c0_135 = arith.constant 0 : index
    %110 = vector.load %arg1[%c14_133, %c0_134, %c0_135] : memref<28x8x28xf32, #tpu.memory_space<vmem>>, vector<1x8x28xf32>
    %111 = vector.shape_cast %110 : vector<1x8x28xf32> to vector<8x28xf32>
    %c16_136 = arith.constant 16 : index
    %c0_137 = arith.constant 0 : index
    %c0_138 = arith.constant 0 : index
    %112 = vector.load %arg1[%c16_136, %c0_137, %c0_138] : memref<28x8x28xf32, #tpu.memory_space<vmem>>, vector<1x8x28xf32>
    %113 = vector.shape_cast %112 : vector<1x8x28xf32> to vector<8x28xf32>
    %c18_139 = arith.constant 18 : index
    %c0_140 = arith.constant 0 : index
    %c0_141 = arith.constant 0 : index
    %114 = vector.load %arg1[%c18_139, %c0_140, %c0_141] : memref<28x8x28xf32, #tpu.memory_space<vmem>>, vector<1x8x28xf32>
    %115 = vector.shape_cast %114 : vector<1x8x28xf32> to vector<8x28xf32>
    %c20_142 = arith.constant 20 : index
    %c0_143 = arith.constant 0 : index
    %c0_144 = arith.constant 0 : index
    %116 = vector.load %arg1[%c20_142, %c0_143, %c0_144] : memref<28x8x28xf32, #tpu.memory_space<vmem>>, vector<1x8x28xf32>
    %117 = vector.shape_cast %116 : vector<1x8x28xf32> to vector<8x28xf32>
    %c22_145 = arith.constant 22 : index
    %c0_146 = arith.constant 0 : index
    %c0_147 = arith.constant 0 : index
    %118 = vector.load %arg1[%c22_145, %c0_146, %c0_147] : memref<28x8x28xf32, #tpu.memory_space<vmem>>, vector<1x8x28xf32>
    %119 = vector.shape_cast %118 : vector<1x8x28xf32> to vector<8x28xf32>
    %c24_148 = arith.constant 24 : index
    %c0_149 = arith.constant 0 : index
    %c0_150 = arith.constant 0 : index
    %120 = vector.load %arg1[%c24_148, %c0_149, %c0_150] : memref<28x8x28xf32, #tpu.memory_space<vmem>>, vector<1x8x28xf32>
    %121 = vector.shape_cast %120 : vector<1x8x28xf32> to vector<8x28xf32>
    %c26 = arith.constant 26 : index
    %c0_151 = arith.constant 0 : index
    %c0_152 = arith.constant 0 : index
    %122 = vector.load %arg1[%c26, %c0_151, %c0_152] : memref<28x8x28xf32, #tpu.memory_space<vmem>>, vector<1x8x28xf32>
    %123 = vector.shape_cast %122 : vector<1x8x28xf32> to vector<8x28xf32>
    %124 = tpu.concatenate %101, %103, %105, %107, %109, %111, %113, %115, %117, %119, %121, %123 in 0 : vector<8x28xf32>, vector<8x28xf32>, vector<8x28xf32>, vector<8x28xf32>, vector<8x28xf32>, vector<8x28xf32>, vector<8x28xf32>, vector<8x28xf32>, vector<8x28xf32>, vector<8x28xf32>, vector<8x28xf32>, vector<8x28xf32> -> vector<96x28xf32>
    %125 = tpu.concatenate %24, %49, %74, %99, %124 in 1 : vector<96x28xf32>, vector<96x28xf32>, vector<96x28xf32>, vector<96x28xf32>, vector<96x28xf32> -> vector<96x140xf32>
    %126 = arith.truncf %125 : vector<96x140xf32> to vector<96x140xbf16>
    %c0_153 = arith.constant 0 : index
    %c0_154 = arith.constant 0 : index
    %127 = vector.load %arg2[%c0_153, %c0_154] : memref<140x48xbf16, #tpu.memory_space<vmem>>, vector<140x48xbf16>
    %cst = arith.constant dense<0.000000e+00> : vector<96x48xf32>
    %128 = tpu.matmul %126, %127, %cst {dimension_numbers = #tpu.dot_dimension_numbers<[1], [0], [0], [1], [0, 0, 1, 1], [], []>} : vector<96x140xbf16>, vector<140x48xbf16>, vector<96x48xf32> -> vector<96x48xf32>
    %c0_155 = arith.constant 0 : index
    %c0_156 = arith.constant 0 : index
    %129 = vector.load %arg3[%c0_155, %c0_156] : memref<1x48xf32, #tpu.memory_space<vmem>>, vector<1x48xf32>
    %130 = vector.broadcast %129 : vector<1x48xf32> to vector<96x48xf32>
    %131 = arith.addf %128, %130 : vector<96x48xf32>
    %cst_157 = arith.constant 0.000000e+00 : f32
    %132 = vector.broadcast %cst_157 : f32 to vector<96x48xf32>
    %133 = arith.maximumf %131, %132 : vector<96x48xf32>
    %134 = vector.extract_strided_slice %133 {offsets = [0, 0], sizes = [8, 48], strides = [1, 1]} : vector<96x48xf32> to vector<8x48xf32>
    %135 = vector.extract_strided_slice %133 {offsets = [16, 0], sizes = [8, 48], strides = [1, 1]} : vector<96x48xf32> to vector<8x48xf32>
    %136 = vector.extract_strided_slice %133 {offsets = [32, 0], sizes = [8, 48], strides = [1, 1]} : vector<96x48xf32> to vector<8x48xf32>
    %137 = vector.extract_strided_slice %133 {offsets = [48, 0], sizes = [8, 48], strides = [1, 1]} : vector<96x48xf32> to vector<8x48xf32>
    %138 = vector.extract_strided_slice %133 {offsets = [64, 0], sizes = [8, 48], strides = [1, 1]} : vector<96x48xf32> to vector<8x48xf32>
    %139 = tpu.concatenate %134, %135, %136, %137, %138 in 0 : vector<8x48xf32>, vector<8x48xf32>, vector<8x48xf32>, vector<8x48xf32>, vector<8x48xf32> -> vector<40x48xf32>
    %140 = vector.extract_strided_slice %133 {offsets = [8, 0], sizes = [8, 48], strides = [1, 1]} : vector<96x48xf32> to vector<8x48xf32>
    %141 = vector.extract_strided_slice %133 {offsets = [24, 0], sizes = [8, 48], strides = [1, 1]} : vector<96x48xf32> to vector<8x48xf32>
    %142 = vector.extract_strided_slice %133 {offsets = [40, 0], sizes = [8, 48], strides = [1, 1]} : vector<96x48xf32> to vector<8x48xf32>
    %143 = vector.extract_strided_slice %133 {offsets = [56, 0], sizes = [8, 48], strides = [1, 1]} : vector<96x48xf32> to vector<8x48xf32>
    %144 = vector.extract_strided_slice %133 {offsets = [72, 0], sizes = [8, 48], strides = [1, 1]} : vector<96x48xf32> to vector<8x48xf32>
    %145 = tpu.concatenate %140, %141, %142, %143, %144 in 0 : vector<8x48xf32>, vector<8x48xf32>, vector<8x48xf32>, vector<8x48xf32>, vector<8x48xf32> -> vector<40x48xf32>
    %146 = vector.extract_strided_slice %133 {offsets = [16, 0], sizes = [8, 48], strides = [1, 1]} : vector<96x48xf32> to vector<8x48xf32>
    %147 = vector.extract_strided_slice %133 {offsets = [32, 0], sizes = [8, 48], strides = [1, 1]} : vector<96x48xf32> to vector<8x48xf32>
    %148 = vector.extract_strided_slice %133 {offsets = [48, 0], sizes = [8, 48], strides = [1, 1]} : vector<96x48xf32> to vector<8x48xf32>
    %149 = vector.extract_strided_slice %133 {offsets = [64, 0], sizes = [8, 48], strides = [1, 1]} : vector<96x48xf32> to vector<8x48xf32>
    %150 = vector.extract_strided_slice %133 {offsets = [80, 0], sizes = [8, 48], strides = [1, 1]} : vector<96x48xf32> to vector<8x48xf32>
    %151 = tpu.concatenate %146, %147, %148, %149, %150 in 0 : vector<8x48xf32>, vector<8x48xf32>, vector<8x48xf32>, vector<8x48xf32>, vector<8x48xf32> -> vector<40x48xf32>
    %152 = tpu.concatenate %139, %145, %151 in 1 : vector<40x48xf32>, vector<40x48xf32>, vector<40x48xf32> -> vector<40x144xf32>
    %153 = arith.truncf %152 : vector<40x144xf32> to vector<40x144xbf16>
    %c0_158 = arith.constant 0 : index
    %c0_159 = arith.constant 0 : index
    %154 = vector.load %arg4[%c0_158, %c0_159] : memref<144x40xbf16, #tpu.memory_space<vmem>>, vector<144x40xbf16>
    %cst_160 = arith.constant dense<0.000000e+00> : vector<40x40xf32>
    %155 = tpu.matmul %153, %154, %cst_160 {dimension_numbers = #tpu.dot_dimension_numbers<[1], [0], [0], [1], [0, 0, 1, 1], [], []>} : vector<40x144xbf16>, vector<144x40xbf16>, vector<40x40xf32> -> vector<40x40xf32>
    %c0_161 = arith.constant 0 : index
    %c0_162 = arith.constant 0 : index
    %156 = vector.load %arg5[%c0_161, %c0_162] : memref<1x40xf32, #tpu.memory_space<vmem>>, vector<1x40xf32>
    %157 = vector.broadcast %156 : vector<1x40xf32> to vector<40x40xf32>
    %158 = arith.addf %155, %157 : vector<40x40xf32>
    %cst_163 = arith.constant 0.000000e+00 : f32
    %159 = vector.broadcast %cst_163 : f32 to vector<40x40xf32>
    %160 = arith.maximumf %158, %159 : vector<40x40xf32>
    %161 = vector.extract_strided_slice %160 {offsets = [0, 0], sizes = [8, 40], strides = [1, 1]} : vector<40x40xf32> to vector<8x40xf32>
    %162 = vector.extract_strided_slice %160 {offsets = [8, 0], sizes = [8, 40], strides = [1, 1]} : vector<40x40xf32> to vector<8x40xf32>
    %163 = vector.extract_strided_slice %160 {offsets = [16, 0], sizes = [8, 40], strides = [1, 1]} : vector<40x40xf32> to vector<8x40xf32>
    %164 = vector.extract_strided_slice %160 {offsets = [24, 0], sizes = [8, 40], strides = [1, 1]} : vector<40x40xf32> to vector<8x40xf32>
    %165 = vector.extract_strided_slice %160 {offsets = [32, 0], sizes = [8, 40], strides = [1, 1]} : vector<40x40xf32> to vector<8x40xf32>
    %166 = tpu.concatenate %161, %162, %163, %164, %165 in 1 : vector<8x40xf32>, vector<8x40xf32>, vector<8x40xf32>, vector<8x40xf32>, vector<8x40xf32> -> vector<8x200xf32>
    %167 = arith.truncf %166 : vector<8x200xf32> to vector<8x200xbf16>
    %c0_164 = arith.constant 0 : index
    %c0_165 = arith.constant 0 : index
    %168 = vector.load %arg6[%c0_164, %c0_165] : memref<200x128xbf16, #tpu.memory_space<vmem>>, vector<200x128xbf16>
    %cst_166 = arith.constant dense<0.000000e+00> : vector<8x128xf32>
    %169 = tpu.matmul %167, %168, %cst_166 {dimension_numbers = #tpu.dot_dimension_numbers<[1], [0], [0], [1], [0, 0, 1, 1], [], []>} : vector<8x200xbf16>, vector<200x128xbf16>, vector<8x128xf32> -> vector<8x128xf32>
    %c0_167 = arith.constant 0 : index
    %c0_168 = arith.constant 0 : index
    %170 = vector.load %arg7[%c0_167, %c0_168] : memref<1x128xf32, #tpu.memory_space<vmem>>, vector<1x128xf32>
    %171 = vector.broadcast %170 : vector<1x128xf32> to vector<8x128xf32>
    %172 = arith.addf %169, %171 : vector<8x128xf32>
    %c0_169 = arith.constant 0 : index
    %c0_170 = arith.constant 0 : index
    %173 = vector.load %arg8[%c0_169, %c0_170] : memref<8x128xf32, #tpu.memory_space<vmem>>, vector<8x128xf32>
    tpu.vector_store %arg8[%c0_169, %c0_170], %172 {strides = array<i32>} : memref<8x128xf32, #tpu.memory_space<vmem>>, vector<8x128xf32>,
    return
  }
  func.func @transform_0(%arg0: i32) -> (i32, i32, i32) {
    %c0_i32 = arith.constant 0 : i32
    %c0_i32_0 = arith.constant 0 : i32
    %c0_i32_1 = arith.constant 0 : i32
    return %c0_i32, %arg0, %c0_i32_0 : i32, i32, i32
  }
  func.func @transform_1(%arg0: i32) -> (i32, i32) {
    %c0_i32 = arith.constant 0 : i32
    %c0_i32_0 = arith.constant 0 : i32
    %c0_i32_1 = arith.constant 0 : i32
    return %c0_i32, %c0_i32_0 : i32, i32
  }
  func.func @transform_2(%arg0: i32) -> (i32, i32) {
    %c0_i32 = arith.constant 0 : i32
    %c0_i32_0 = arith.constant 0 : i32
    %c0_i32_1 = arith.constant 0 : i32
    return %c0_i32, %c0_i32_0 : i32, i32
  }
  func.func @transform_3(%arg0: i32) -> (i32, i32) {
    %c0_i32 = arith.constant 0 : i32
    %c0_i32_0 = arith.constant 0 : i32
    %c0_i32_1 = arith.constant 0 : i32
    return %c0_i32, %c0_i32_0 : i32, i32
  }
  func.func @transform_4(%arg0: i32) -> (i32, i32) {
    %c0_i32 = arith.constant 0 : i32
    %c0_i32_0 = arith.constant 0 : i32
    %c0_i32_1 = arith.constant 0 : i32
    return %c0_i32, %c0_i32_0 : i32, i32
  }
  func.func @transform_5(%arg0: i32) -> (i32, i32) {
    %c0_i32 = arith.constant 0 : i32
    %c0_i32_0 = arith.constant 0 : i32
    %c0_i32_1 = arith.constant 0 : i32
    return %c0_i32, %c0_i32_0 : i32, i32
  }
  func.func @transform_6(%arg0: i32) -> (i32, i32) {
    %c0_i32 = arith.constant 0 : i32
    %c0_i32_0 = arith.constant 0 : i32
    %c0_i32_1 = arith.constant 0 : i32
    return %c0_i32, %c0_i32_0 : i32, i32
  }
  func.func @transform_7(%arg0: i32) -> (i32, i32) {
    %c0_i32 = arith.constant 0 : i32
    %c0_i32_0 = arith.constant 0 : i32
    return %arg0, %c0_i32 : i32, i32
  }
}

</mosaic_0001>

<llo_original>
// kernel: simple_cnn_forward.1
$region0: #{simple_cnn_forward.1}
  #allocation0 [shape = 'u32[]', space=smem, size = 0x4, offset = 0x4, fixed_abs, tag = 'smem constant byte address 0x4 - core index']
  #allocation1 [shape = 'u32[144,128]{1,0:T(1,128)}', space=vmem, size = 0x12000, scoped, tag = 'internal scratch']
  %s0 = inlined_call_operand.vmem [shape: f32[28,16,28], index: 0, kind: input, shape index: {}]
  %s1 = inlined_call_operand.vmem [shape: bf16[140,48], index: 1, kind: input, shape index: {}]
  %s2 = inlined_call_operand.vmem [shape: f32[1,48], index: 2, kind: input, shape index: {}]
  %s3 = inlined_call_operand.vmem [shape: bf16[144,40], index: 3, kind: input, shape index: {}]
  %s4 = inlined_call_operand.vmem [shape: f32[1,40], index: 4, kind: input, shape index: {}]
  %s5 = inlined_call_operand.vmem [shape: bf16[200,128], index: 5, kind: input, shape index: {}]
  %s6 = inlined_call_operand.vmem [shape: f32[1,128], index: 6, kind: input, shape index: {}]
  %s7 = inlined_call_operand.hbm [shape: f32[16,128], index: 7, kind: output, shape index: {}]
  %s8 = sld [smem:[#allocation0]]
  $region99: #{simple_cnn_forward.1} parent=0
    _
  %s10 = ssub.s32 1, %s8
  %s11 = scalar_select 0, %s10, %s8
  $region1: #{simple_cnn_forward.1} parent=0
    #allocation2 [shape = 'u8[229376]{0}', space=vmem, size = 0x38000, scoped, tag = 'input window, operand 0']
    #allocation3 [shape = 'u8[8192]{0}', space=vmem, size = 0x2000, scoped, tag = 'output window, operand 0']
    #allocation4 [shape = 's32[2]{0}', space=sflag, size = 0x8, scoped, tag = 'scoped memory for simple_cnn_forward.1']
    %12 = vsyncpa [#allocation4], 0
    %s13 = scalar_lea.sflag [#allocation4], 1
    %14 = vsyncpa %s13, 0
    loop: start=0, step=1, limit=4
    $region2: #{simple_cnn_forward.1} parent=1 // loop_pre_header
      _
    $region3: #{simple_cnn_forward.1} parent=1 // loop_header
      %s16 = sphi 0, %s20
      %p17 = scmp.ge.s32.totalorder %s16, 4
      %s26 = sphi 0, %s28
      %s29 = sphi 0, %s26
      %s30 = sphi 0, %s29
      %s46 = sphi 0, %s30
      %s50 = sphi 0, %s50
      %s52 = sphi 0, %s50
      %s53 = sphi 0, %s52
      %s67 = sphi 0, %s53
      %s71 = sphi 0, %s71
      %s73 = sphi 0, %s71
      %s74 = sphi 0, %s73
      %s88 = sphi 0, %s74
      %s92 = sphi 0, %s92
      %s94 = sphi 0, %s92
      %s95 = sphi 0, %s94
      %s109 = sphi 0, %s95
      %s113 = sphi 0, %s113
      %s115 = sphi 0, %s113
      %s116 = sphi 0, %s115
      %s130 = sphi 0, %s116
      %s134 = sphi 0, %s134
      %s136 = sphi 0, %s134
      %s137 = sphi 0, %s136
      %s151 = sphi 0, %s137
      %s155 = sphi 0, %s155
      %s157 = sphi 0, %s155
      %s158 = sphi 0, %s157
      %s172 = sphi 0, %s158
      %s178 = sphi 0, %s180
      %s181 = sphi 0, %s178
      %s182 = sphi 0, %s181
      %s198 = sphi 0, %s182
    $region4: #{simple_cnn_forward.1} parent=1 // loop_header_branch
      %19 = sbr.rel (%p17) target = $region8
    $region5: #{simple_cnn_forward.1} parent=1 // loop_body
      %s21 = ssub.s32 %s16, 1
      %s22 = ssub.s32 %s16, 2
      %s23 = sadd.s32 %s16, 1
      %s24 = ssub.s32 %s16, %s23
      %p25 = scmp.eq.s32.totalorder %s24, 0
      %s27 = sadd.s32 %s26, 1
      %s28 = scalar_select %p25, %s26, %s27
      %p31 = pneg %p25
      %p32 = scmp.eq.s32.totalorder %s16, 1
      %p33 = por %p31, %p32
      %p34 = scmp.ne.s32.totalorder %s26, %s29
      %p35 = scmp.eq.s32.totalorder %s16, 0
      %p36 = por %p34, %p35
      %p37 = scmp.ne.s32.totalorder %s26, %s29
      %p38 = scmp.eq.s32.totalorder %s21, 1
      %p39 = por %p37, %p38
      %p40 = scmp.ne.s32.totalorder %s29, %s30
      %p41 = scmp.eq.s32.totalorder %s21, 0
      %p42 = por %p40, %p41
      %p43 = scmp.ne.s32.totalorder %s29, %s30
      %p44 = scmp.eq.s32.totalorder %s22, 1
      %p45 = por %p43, %p44
      %p47 = scmp.ne.s32.totalorder %s30, %s46
      %p48 = scmp.eq.s32.totalorder %s22, 0
      %p49 = por %p47, %p48
      %s51 = sadd.s32 %s50, 1
      %p54 = scmp.eq.s32.totalorder %s16, 1
      %p55 = scmp.ne.s32.totalorder %s50, %s52
      %p56 = scmp.eq.s32.totalorder %s16, 0
      %p57 = por %p55, %p56
      %p58 = scmp.ne.s32.totalorder %s50, %s52
      %p59 = scmp.eq.s32.totalorder %s21, 1
      %p60 = por %p58, %p59
      %p61 = scmp.ne.s32.totalorder %s52, %s53
      %p62 = scmp.eq.s32.totalorder %s21, 0
      %p63 = por %p61, %p62
      %p64 = scmp.ne.s32.totalorder %s52, %s53
      %p65 = scmp.eq.s32.totalorder %s22, 1
      %p66 = por %p64, %p65
      %p68 = scmp.ne.s32.totalorder %s53, %s67
      %p69 = scmp.eq.s32.totalorder %s22, 0
      %p70 = por %p68, %p69
      %s72 = sadd.s32 %s71, 1
      %p75 = scmp.eq.s32.totalorder %s16, 1
      %p76 = scmp.ne.s32.totalorder %s71, %s73
      %p77 = scmp.eq.s32.totalorder %s16, 0
      %p78 = por %p76, %p77
      %p79 = scmp.ne.s32.totalorder %s71, %s73
      %p80 = scmp.eq.s32.totalorder %s21, 1
      %p81 = por %p79, %p80
      %p82 = scmp.ne.s32.totalorder %s73, %s74
      %p83 = scmp.eq.s32.totalorder %s21, 0
      %p84 = por %p82, %p83
      %p85 = scmp.ne.s32.totalorder %s73, %s74
      %p86 = scmp.eq.s32.totalorder %s22, 1
      %p87 = por %p85, %p86
      %p89 = scmp.ne.s32.totalorder %s74, %s88
      %p90 = scmp.eq.s32.totalorder %s22, 0
      %p91 = por %p89, %p90
      %s93 = sadd.s32 %s92, 1
      %p96 = scmp.eq.s32.totalorder %s16, 1
      %p97 = scmp.ne.s32.totalorder %s92, %s94
      %p98 = scmp.eq.s32.totalorder %s16, 0
      %p99 = por %p97, %p98
      %p100 = scmp.ne.s32.totalorder %s92, %s94
      %p101 = scmp.eq.s32.totalorder %s21, 1
      %p102 = por %p100, %p101
      %p103 = scmp.ne.s32.totalorder %s94, %s95
      %p104 = scmp.eq.s32.totalorder %s21, 0
      %p105 = por %p103, %p104
      %p106 = scmp.ne.s32.totalorder %s94, %s95
      %p107 = scmp.eq.s32.totalorder %s22, 1
      %p108 = por %p106, %p107
      %p110 = scmp.ne.s32.totalorder %s95, %s109
      %p111 = scmp.eq.s32.totalorder %s22, 0
      %p112 = por %p110, %p111
      %s114 = sadd.s32 %s113, 1
      %p117 = scmp.eq.s32.totalorder %s16, 1
      %p118 = scmp.ne.s32.totalorder %s113, %s115
      %p119 = scmp.eq.s32.totalorder %s16, 0
      %p120 = por %p118, %p119
      %p121 = scmp.ne.s32.totalorder %s113, %s115
      %p122 = scmp.eq.s32.totalorder %s21, 1
      %p123 = por %p121, %p122
      %p124 = scmp.ne.s32.totalorder %s115, %s116
      %p125 = scmp.eq.s32.totalorder %s21, 0
      %p126 = por %p124, %p125
      %p127 = scmp.ne.s32.totalorder %s115, %s116
      %p128 = scmp.eq.s32.totalorder %s22, 1
      %p129 = por %p127, %p128
      %p131 = scmp.ne.s32.totalorder %s116, %s130
      %p132 = scmp.eq.s32.totalorder %s22, 0
      %p133 = por %p131, %p132
      %s135 = sadd.s32 %s134, 1
      %p138 = scmp.eq.s32.totalorder %s16, 1
      %p139 = scmp.ne.s32.totalorder %s134, %s136
      %p140 = scmp.eq.s32.totalorder %s16, 0
      %p141 = por %p139, %p140
      %p142 = scmp.ne.s32.totalorder %s134, %s136
      %p143 = scmp.eq.s32.totalorder %s21, 1
      %p144 = por %p142, %p143
      %p145 = scmp.ne.s32.totalorder %s136, %s137
      %p146 = scmp.eq.s32.totalorder %s21, 0
      %p147 = por %p145, %p146
      %p148 = scmp.ne.s32.totalorder %s136, %s137
      %p149 = scmp.eq.s32.totalorder %s22, 1
      %p150 = por %p148, %p149
      %p152 = scmp.ne.s32.totalorder %s137, %s151
      %p153 = scmp.eq.s32.totalorder %s22, 0
      %p154 = por %p152, %p153
      %s156 = sadd.s32 %s155, 1
      %p159 = scmp.eq.s32.totalorder %s16, 1
      %p160 = scmp.ne.s32.totalorder %s155, %s157
      %p161 = scmp.eq.s32.totalorder %s16, 0
      %p162 = por %p160, %p161
      %p163 = scmp.ne.s32.totalorder %s155, %s157
      %p164 = scmp.eq.s32.totalorder %s21, 1
      %p165 = por %p163, %p164
      %p166 = scmp.ne.s32.totalorder %s157, %s158
      %p167 = scmp.eq.s32.totalorder %s21, 0
      %p168 = por %p166, %p167
      %p169 = scmp.ne.s32.totalorder %s157, %s158
      %p170 = scmp.eq.s32.totalorder %s22, 1
      %p171 = por %p169, %p170
      %p173 = scmp.ne.s32.totalorder %s158, %s172
      %p174 = scmp.eq.s32.totalorder %s22, 0
      %p175 = por %p173, %p174
      %s176 = ssub.s32 %s16, %s23
      %p177 = scmp.eq.s32.totalorder %s176, 0
      %s179 = sadd.s32 %s178, 1
      %s180 = scalar_select %p177, %s178, %s179
      %p183 = pneg %p177
      %p184 = scmp.eq.s32.totalorder %s16, 1
      %p185 = por %p183, %p184
      %p186 = scmp.ne.s32.totalorder %s178, %s181
      %p187 = scmp.eq.s32.totalorder %s16, 0
      %p188 = por %p186, %p187
      %p189 = scmp.ne.s32.totalorder %s178, %s181
      %p190 = scmp.eq.s32.totalorder %s21, 1
      %p191 = por %p189, %p190
      %p192 = scmp.ne.s32.totalorder %s181, %s182
      %p193 = scmp.eq.s32.totalorder %s21, 0
      %p194 = por %p192, %p193
      %p195 = scmp.ne.s32.totalorder %s181, %s182
      %p196 = scmp.eq.s32.totalorder %s22, 1
      %p197 = por %p195, %p196
      %p199 = scmp.ne.s32.totalorder %s182, %s198
      %p200 = scmp.eq.s32.totalorder %s22, 0
      %p201 = por %p199, %p200
      %p202 = scmp.le.s32.totalorder 1, %s16
      %p203 = scmp.lt.s32.totalorder %s16, 3
      %p204 = pnand %p202, %p203
      %p205 = pneg %p204
      // Predicated region
      $region9: #{simple_cnn_forward.1} parent=5 // pred_check
        _
      $region10: #{simple_cnn_forward.1} parent=5 // pred_check_branch
        %207 = sbr.rel (%p204) target = $region12
      $region11: #{simple_cnn_forward.1} parent=5 // pred_region
        %s208 = ssub.s32 %s16, 1
        // Predicated region
        $region13: #{simple_cnn_forward.1} parent=11 // pred_check
          %p209 = pneg %p63
        $region14: #{simple_cnn_forward.1} parent=11 // pred_check_branch
          %211 = sbr.rel (%p209) target = $region16
        $region15: #{simple_cnn_forward.1} parent=11 // pred_region
          _
        $region16: #{simple_cnn_forward.1} parent=11 // pred_fallthru
          _
        // Predicated region
        $region17: #{simple_cnn_forward.1} parent=11 // pred_check
          %p212 = pneg %p84
        $region18: #{simple_cnn_forward.1} parent=11 // pred_check_branch
          %214 = sbr.rel (%p212) target = $region20
        $region19: #{simple_cnn_forward.1} parent=11 // pred_region
          _
        $region20: #{simple_cnn_forward.1} parent=11 // pred_fallthru
          _
        // Predicated region
        $region21: #{simple_cnn_forward.1} parent=11 // pred_check
          %p215 = pneg %p105
        $region22: #{simple_cnn_forward.1} parent=11 // pred_check_branch
          %217 = sbr.rel (%p215) target = $region24
        $region23: #{simple_cnn_forward.1} parent=11 // pred_region
          _
        $region24: #{simple_cnn_forward.1} parent=11 // pred_fallthru
          _
        // Predicated region
        $region25: #{simple_cnn_forward.1} parent=11 // pred_check
          %p218 = pneg %p126
        $region26: #{simple_cnn_forward.1} parent=11 // pred_check_branch
          %220 = sbr.rel (%p218) target = $region28
        $region27: #{simple_cnn_forward.1} parent=11 // pred_region
          _
        $region28: #{simple_cnn_forward.1} parent=11 // pred_fallthru
          _
        // Predicated region
        $region29: #{simple_cnn_forward.1} parent=11 // pred_check
          %p221 = pneg %p147
        $region30: #{simple_cnn_forward.1} parent=11 // pred_check_branch
          %223 = sbr.rel (%p221) target = $region32
        $region31: #{simple_cnn_forward.1} parent=11 // pred_region
          _
        $region32: #{simple_cnn_forward.1} parent=11 // pred_fallthru
          _
        // Predicated region
        $region33: #{simple_cnn_forward.1} parent=11 // pred_check
          %p224 = pneg %p168
        $region34: #{simple_cnn_forward.1} parent=11 // pred_check_branch
          %226 = sbr.rel (%p224) target = $region36
        $region35: #{simple_cnn_forward.1} parent=11 // pred_region
          _
        $region36: #{simple_cnn_forward.1} parent=11 // pred_fallthru
          _
      $region12: #{simple_cnn_forward.1} parent=5 // pred_fallthru
        _
      %p227 = scmp.lt.s32.totalorder %s16, 2
      // Predicated region
      $region37: #{simple_cnn_forward.1} parent=5 // pred_check
        %p228 = pneg %p227
      $region38: #{simple_cnn_forward.1} parent=5 // pred_check_branch
        %230 = sbr.rel (%p228) target = $region40
      $region39: #{simple_cnn_forward.1} parent=5 // pred_region
        // Predicated region
        $region41: #{simple_cnn_forward.1} parent=39 // pred_check
          %p231 = pneg %p36
        $region42: #{simple_cnn_forward.1} parent=39 // pred_check_branch
          %233 = sbr.rel (%p231) target = $region44
        $region43: #{simple_cnn_forward.1} parent=39 // pred_region
          %s234 = sand.u32 %s26, 1
          %s235 = sand.u32 %s26, 1
          %s236 = smul.addr %s235, 224
          %s237 = scalar_lea.vmem [#allocation2], %s236
          %s238 = smul.addr %s16, 8
          %s239 = scalar_lea.vmem %s0, %s238
          // Predicated region
          $region45: #{simple_cnn_forward.1} parent=43 // pred_check
            _
          $region46: #{simple_cnn_forward.1} parent=43 // pred_check_branch
            %241 = sbr.rel (0) target = $region48
          $region47: #{simple_cnn_forward.1} parent=43 // pred_region
            // Predicated region
            $region49: #{simple_cnn_forward.1} parent=47 // pred_check
              _
            $region50: #{simple_cnn_forward.1} parent=47 // pred_check_branch
              %243 = sbr.rel (0) target = $region52
            $region51: #{simple_cnn_forward.1} parent=47 // pred_region
              // Predicated region
              $region64: #{simple_cnn_forward.1} parent=51 // pred_check
                _
              $region65: #{simple_cnn_forward.1} parent=51 // pred_check_branch
                %312 = sbr.rel (0) target = $region67
              $region66: #{simple_cnn_forward.1} parent=51 // pred_region
                loop: start=0, step=1, limit=1
                $region68: #{simple_cnn_forward.1} parent=66 // loop_pre_header
                  _
                $region69: #{simple_cnn_forward.1} parent=66 // loop_header
                  %s314 = sphi 0, %s318
                  %p315 = scmp.ge.s32.totalorder %s314, 1
                  %s319 = sphi %s239, %s239
                  %s320 = sphi %s237, %s237
                $region70: #{simple_cnn_forward.1} parent=66 // loop_header_branch
                  %317 = sbr.rel (%p315) target = $region74
                $region71: #{simple_cnn_forward.1} parent=66 // loop_body
                  %v321 = vld [vmem:[%s319] sm:$0xff]
                  %322 = vst [vmem:[%s320] sm:$0xff] %v321
                  %v323 = vld [vmem:[%s319 + $0x10] sm:$0xff]
                  %324 = vst [vmem:[%s320 + $0x8] sm:$0xff] %v323
                  %v325 = vld [vmem:[%s319 + $0x20] sm:$0xff]
                  %326 = vst [vmem:[%s320 + $0x10] sm:$0xff] %v325
                  %v327 = vld [vmem:[%s319 + $0x30] sm:$0xff]
                  %328 = vst [vmem:[%s320 + $0x18] sm:$0xff] %v327
                  %v329 = vld [vmem:[%s319 + $0x40] sm:$0xff]
                  %330 = vst [vmem:[%s320 + $0x20] sm:$0xff] %v329
                  %v331 = vld [vmem:[%s319 + $0x50] sm:$0xff]
                  %332 = vst [vmem:[%s320 + $0x28] sm:$0xff] %v331
                  %v333 = vld [vmem:[%s319 + $0x60] sm:$0xff]
                  %334 = vst [vmem:[%s320 + $0x30] sm:$0xff] %v333
                  %v335 = vld [vmem:[%s319 + $0x70] sm:$0xff]
                  %336 = vst [vmem:[%s320 + $0x38] sm:$0xff] %v335
                  %v337 = vld [vmem:[%s319 + $0x80] sm:$0xff]
                  %338 = vst [vmem:[%s320 + $0x40] sm:$0xff] %v337
                  %v339 = vld [vmem:[%s319 + $0x90] sm:$0xff]
                  %340 = vst [vmem:[%s320 + $0x48] sm:$0xff] %v339
                  %v341 = vld [vmem:[%s319 + $0xa0] sm:$0xff]
                  %342 = vst [vmem:[%s320 + $0x50] sm:$0xff] %v341
                  %v343 = vld [vmem:[%s319 + $0xb0] sm:$0xff]
                  %344 = vst [vmem:[%s320 + $0x58] sm:$0xff] %v343
                  %v345 = vld [vmem:[%s319 + $0xc0] sm:$0xff]
                  %346 = vst [vmem:[%s320 + $0x60] sm:$0xff] %v345
                  %v347 = vld [vmem:[%s319 + $0xd0] sm:$0xff]
                  %348 = vst [vmem:[%s320 + $0x68] sm:$0xff] %v347
                  %v349 = vld [vmem:[%s319 + $0xe0] sm:$0xff]
                  %350 = vst [vmem:[%s320 + $0x70] sm:$0xff] %v349
                  %v351 = vld [vmem:[%s319 + $0xf0] sm:$0xff]
                  %352 = vst [vmem:[%s320 + $0x78] sm:$0xff] %v351
                  %v353 = vld [vmem:[%s319 + $0x100] sm:$0xff]
                  %354 = vst [vmem:[%s320 + $0x80] sm:$0xff] %v353
                  %v355 = vld [vmem:[%s319 + $0x110] sm:$0xff]
                  %356 = vst [vmem:[%s320 + $0x88] sm:$0xff] %v355
                  %v357 = vld [vmem:[%s319 + $0x120] sm:$0xff]
                  %358 = vst [vmem:[%s320 + $0x90] sm:$0xff] %v357
                  %v359 = vld [vmem:[%s319 + $0x130] sm:$0xff]
                  %360 = vst [vmem:[%s320 + $0x98] sm:$0xff] %v359
                  %v361 = vld [vmem:[%s319 + $0x140] sm:$0xff]
                  %362 = vst [vmem:[%s320 + $0xa0] sm:$0xff] %v361
                  %v363 = vld [vmem:[%s319 + $0x150] sm:$0xff]
                  %364 = vst [vmem:[%s320 + $0xa8] sm:$0xff] %v363
                  %v365 = vld [vmem:[%s319 + $0x160] sm:$0xff]
                  %366 = vst [vmem:[%s320 + $0xb0] sm:$0xff] %v365
                  %v367 = vld [vmem:[%s319 + $0x170] sm:$0xff]
                  %368 = vst [vmem:[%s320 + $0xb8] sm:$0xff] %v367
                  %v369 = vld [vmem:[%s319 + $0x180] sm:$0xff]
                  %370 = vst [vmem:[%s320 + $0xc0] sm:$0xff] %v369
                  %v371 = vld [vmem:[%s319 + $0x190] sm:$0xff]
                  %372 = vst [vmem:[%s320 + $0xc8] sm:$0xff] %v371
                  %v373 = vld [vmem:[%s319 + $0x1a0] sm:$0xff]
                  %374 = vst [vmem:[%s320 + $0xd0] sm:$0xff] %v373
                  %v375 = vld [vmem:[%s319 + $0x1b0] sm:$0xff]
                  %376 = vst [vmem:[%s320 + $0xd8] sm:$0xff] %v375
                $region72: #{simple_cnn_forward.1} parent=66 // loop_footer
                  %s318 = sadd.s32 1, %s314
                $region73: #{simple_cnn_forward.1} parent=66 // loop_footer_branch
                  %313 = sbr.rel target = $region69
                $region74: #{simple_cnn_forward.1} parent=66 // loop_exit
                  _
              $region67: #{simple_cnn_forward.1} parent=51 // pred_fallthru
                _
              // Predicated region
              $region75: #{simple_cnn_forward.1} parent=51 // pred_check
                _
              $region76: #{simple_cnn_forward.1} parent=51 // pred_check_branch
                %378 = sbr.rel target = $region78
              $region77: #{simple_cnn_forward.1} parent=51 // pred_region
                _
              $region78: #{simple_cnn_forward.1} parent=51 // pred_fallthru
                _
            $region52: #{simple_cnn_forward.1} parent=47 // pred_fallthru
              _
            // Predicated region
            $region53: #{simple_cnn_forward.1} parent=47 // pred_check
              _
            $region54: #{simple_cnn_forward.1} parent=47 // pred_check_branch
              %245 = sbr.rel target = $region56
            $region55: #{simple_cnn_forward.1} parent=47 // pred_region
              loop: start=0, step=1, limit=1
              $region57: #{simple_cnn_forward.1} parent=55 // loop_pre_header
                _
              $region58: #{simple_cnn_forward.1} parent=55 // loop_header
                %s248 = sphi 0, %s252
                %p249 = scmp.ge.s32.totalorder %s248, 1
                %s253 = sphi %s239, %s239
                %s254 = sphi %s237, %s237
              $region59: #{simple_cnn_forward.1} parent=55 // loop_header_branch
                %251 = sbr.rel (%p249) target = $region63
              $region60: #{simple_cnn_forward.1} parent=55 // loop_body
                %v255 = vld [vmem:[%s253] sm:$0xff]
                %256 = vst [vmem:[%s254] sm:$0xff] %v255
                %v257 = vld [vmem:[%s253 + $0x10] sm:$0xff]
                %258 = vst [vmem:[%s254 + $0x8] sm:$0xff] %v257
                %v259 = vld [vmem:[%s253 + $0x20] sm:$0xff]
                %260 = vst [vmem:[%s254 + $0x10] sm:$0xff] %v259
                %v261 = vld [vmem:[%s253 + $0x30] sm:$0xff]
                %262 = vst [vmem:[%s254 + $0x18] sm:$0xff] %v261
                %v263 = vld [vmem:[%s253 + $0x40] sm:$0xff]
                %264 = vst [vmem:[%s254 + $0x20] sm:$0xff] %v263
                %v265 = vld [vmem:[%s253 + $0x50] sm:$0xff]
                %266 = vst [vmem:[%s254 + $0x28] sm:$0xff] %v265
                %v267 = vld [vmem:[%s253 + $0x60] sm:$0xff]
                %268 = vst [vmem:[%s254 + $0x30] sm:$0xff] %v267
                %v269 = vld [vmem:[%s253 + $0x70] sm:$0xff]
                %270 = vst [vmem:[%s254 + $0x38] sm:$0xff] %v269
                %v271 = vld [vmem:[%s253 + $0x80] sm:$0xff]
                %272 = vst [vmem:[%s254 + $0x40] sm:$0xff] %v271
                %v273 = vld [vmem:[%s253 + $0x90] sm:$0xff]
                %274 = vst [vmem:[%s254 + $0x48] sm:$0xff] %v273
                %v275 = vld [vmem:[%s253 + $0xa0] sm:$0xff]
                %276 = vst [vmem:[%s254 + $0x50] sm:$0xff] %v275
                %v277 = vld [vmem:[%s253 + $0xb0] sm:$0xff]
                %278 = vst [vmem:[%s254 + $0x58] sm:$0xff] %v277
                %v279 = vld [vmem:[%s253 + $0xc0] sm:$0xff]
                %280 = vst [vmem:[%s254 + $0x60] sm:$0xff] %v279
                %v281 = vld [vmem:[%s253 + $0xd0] sm:$0xff]
                %282 = vst [vmem:[%s254 + $0x68] sm:$0xff] %v281
                %v283 = vld [vmem:[%s253 + $0xe0] sm:$0xff]
                %284 = vst [vmem:[%s254 + $0x70] sm:$0xff] %v283
                %v285 = vld [vmem:[%s253 + $0xf0] sm:$0xff]
                %286 = vst [vmem:[%s254 + $0x78] sm:$0xff] %v285
                %v287 = vld [vmem:[%s253 + $0x100] sm:$0xff]
                %288 = vst [vmem:[%s254 + $0x80] sm:$0xff] %v287
                %v289 = vld [vmem:[%s253 + $0x110] sm:$0xff]
                %290 = vst [vmem:[%s254 + $0x88] sm:$0xff] %v289
                %v291 = vld [vmem:[%s253 + $0x120] sm:$0xff]
                %292 = vst [vmem:[%s254 + $0x90] sm:$0xff] %v291
                %v293 = vld [vmem:[%s253 + $0x130] sm:$0xff]
                %294 = vst [vmem:[%s254 + $0x98] sm:$0xff] %v293
                %v295 = vld [vmem:[%s253 + $0x140] sm:$0xff]
                %296 = vst [vmem:[%s254 + $0xa0] sm:$0xff] %v295
                %v297 = vld [vmem:[%s253 + $0x150] sm:$0xff]
                %298 = vst [vmem:[%s254 + $0xa8] sm:$0xff] %v297
                %v299 = vld [vmem:[%s253 + $0x160] sm:$0xff]
                %300 = vst [vmem:[%s254 + $0xb0] sm:$0xff] %v299
                %v301 = vld [vmem:[%s253 + $0x170] sm:$0xff]
                %302 = vst [vmem:[%s254 + $0xb8] sm:$0xff] %v301
                %v303 = vld [vmem:[%s253 + $0x180] sm:$0xff]
                %304 = vst [vmem:[%s254 + $0xc0] sm:$0xff] %v303
                %v305 = vld [vmem:[%s253 + $0x190] sm:$0xff]
                %306 = vst [vmem:[%s254 + $0xc8] sm:$0xff] %v305
                %v307 = vld [vmem:[%s253 + $0x1a0] sm:$0xff]
                %308 = vst [vmem:[%s254 + $0xd0] sm:$0xff] %v307
                %v309 = vld [vmem:[%s253 + $0x1b0] sm:$0xff]
                %310 = vst [vmem:[%s254 + $0xd8] sm:$0xff] %v309
              $region61: #{simple_cnn_forward.1} parent=55 // loop_footer
                %s252 = sadd.s32 1, %s248
              $region62: #{simple_cnn_forward.1} parent=55 // loop_footer_branch
                %247 = sbr.rel target = $region58
              $region63: #{simple_cnn_forward.1} parent=55 // loop_exit
                _
            $region56: #{simple_cnn_forward.1} parent=47 // pred_fallthru
              _
          $region48: #{simple_cnn_forward.1} parent=43 // pred_fallthru
            _
          %379 = vnop
        $region44: #{simple_cnn_forward.1} parent=39 // pred_fallthru
          _
      $region40: #{simple_cnn_forward.1} parent=5 // pred_fallthru
        _
      %p380 = scmp.le.s32.totalorder 1, %s16
      %p381 = scmp.lt.s32.totalorder %s16, 3
      %p382 = pnand %p380, %p381
      %p383 = pneg %p382
      // Predicated region
      $region79: #{simple_cnn_forward.1} parent=5 // pred_check
        _
      $region80: #{simple_cnn_forward.1} parent=5 // pred_check_branch
        %385 = sbr.rel (%p382) target = $region82
      $region81: #{simple_cnn_forward.1} parent=5 // pred_region
        %s386 = ssub.s32 %s16, 1
        %s387 = sand.u32 %s29, 1
        %s388 = sand.u32 %s29, 1
        %s389 = smul.addr %s388, 224
        %s390 = scalar_lea.vmem [#allocation2], %s389
        // Predicated region
        $region83: #{simple_cnn_forward.1} parent=81 // pred_check
          %p391 = pneg %p42
        $region84: #{simple_cnn_forward.1} parent=81 // pred_check_branch
          %393 = sbr.rel (%p391) target = $region86
        $region85: #{simple_cnn_forward.1} parent=81 // pred_region
          _
        $region86: #{simple_cnn_forward.1} parent=81 // pred_fallthru
          _
        %s394 = sand.u32 %s29, 1
        %s395 = sand.u32 %s29, 1
        %s396 = smul.addr %s395, 224
        %s397 = scalar_lea.vmem [#allocation2], %s396
        %p398 = pneg %p42
        %p399 = pneg %p39
        %p400 = pneg %p63
        %p401 = pneg %p60
        %p402 = pneg %p84
        %p403 = pneg %p81
        %p404 = pneg %p105
        %p405 = pneg %p102
        %p406 = pneg %p126
        %p407 = pneg %p123
        %p408 = pneg %p147
        %p409 = pneg %p144
        %p410 = pneg %p168
        %p411 = pneg %p165
        %p412 = pneg %p194
        %p413 = pneg %p191
        %s414 = sand.u32 %s181, 1
        %s415 = scalar_lea.sflag [#allocation4], %s414
        %s416 = sand.u32 %s181, 1
        %s417 = smul.addr %s416, 8
        %s418 = scalar_lea.vmem [#allocation3], %s417
        %v420 = vld [vmem:[%s390] sm:$0xff]
        %s421 = scalar_lea.vmem %s390, 16 [#allocation2]
        %v422 = vld [vmem:[%s421] sm:$0xff]
        %s423 = scalar_lea.vmem %s390, 32 [#allocation2]
        %v424 = vld [vmem:[%s423] sm:$0xff]
        %s425 = scalar_lea.vmem %s390, 48 [#allocation2]
        %v426 = vld [vmem:[%s425] sm:$0xff]
        %s427 = scalar_lea.vmem %s390, 64 [#allocation2]
        %v428 = vld [vmem:[%s427] sm:$0xff]
        %s429 = scalar_lea.vmem %s390, 80 [#allocation2]
        %v430 = vld [vmem:[%s429] sm:$0xff]
        %s431 = scalar_lea.vmem %s390, 96 [#allocation2]
        %v432 = vld [vmem:[%s431] sm:$0xff]
        %s433 = scalar_lea.vmem %s390, 112 [#allocation2]
        %v434 = vld [vmem:[%s433] sm:$0xff]
        %s435 = scalar_lea.vmem %s390, 128 [#allocation2]
        %v436 = vld [vmem:[%s435] sm:$0xff]
        %s437 = scalar_lea.vmem %s390, 144 [#allocation2]
        %v438 = vld [vmem:[%s437] sm:$0xff]
        %s439 = scalar_lea.vmem %s390, 160 [#allocation2]
        %v440 = vld [vmem:[%s439] sm:$0xff]
        %s441 = scalar_lea.vmem %s390, 176 [#allocation2]
        %v442 = vld [vmem:[%s441] sm:$0xff]
        %s443 = scalar_lea.vmem %s390, 8 [#allocation2]
        %v444 = vld [vmem:[%s443] sm:$0xff]
        %s445 = scalar_lea.vmem %s390, 24 [#allocation2]
        %v446 = vld [vmem:[%s445] sm:$0xff]
        %s447 = scalar_lea.vmem %s390, 40 [#allocation2]
        %v448 = vld [vmem:[%s447] sm:$0xff]
        %s449 = scalar_lea.vmem %s390, 56 [#allocation2]
        %v450 = vld [vmem:[%s449] sm:$0xff]
        %s451 = scalar_lea.vmem %s390, 72 [#allocation2]
        %v452 = vld [vmem:[%s451] sm:$0xff]
        %s453 = scalar_lea.vmem %s390, 88 [#allocation2]
        %v454 = vld [vmem:[%s453] sm:$0xff]
        %s455 = scalar_lea.vmem %s390, 104 [#allocation2]
        %v456 = vld [vmem:[%s455] sm:$0xff]
        %s457 = scalar_lea.vmem %s390, 120 [#allocation2]
        %v458 = vld [vmem:[%s457] sm:$0xff]
        %s459 = scalar_lea.vmem %s390, 136 [#allocation2]
        %v460 = vld [vmem:[%s459] sm:$0xff]
        %s461 = scalar_lea.vmem %s390, 152 [#allocation2]
        %v462 = vld [vmem:[%s461] sm:$0xff]
        %s463 = scalar_lea.vmem %s390, 168 [#allocation2]
        %v464 = vld [vmem:[%s463] sm:$0xff]
        %s465 = scalar_lea.vmem %s390, 184 [#allocation2]
        %v466 = vld [vmem:[%s465] sm:$0xff]
        %s467 = scalar_lea.vmem %s390, 192 [#allocation2]
        %v468 = vld [vmem:[%s467] sm:$0xff]
        %s469 = scalar_lea.vmem %s390, 200 [#allocation2]
        %v470 = vld [vmem:[%s469] sm:$0xff]
        %s471 = scalar_lea.vmem %s390, 208 [#allocation2]
        %v472 = vld [vmem:[%s471] sm:$0xff]
        %485 = vrot.lane.b32.xlu0 %v444, 28
        %v486 = vpop.permute.xlu0 %485
        %487 = vrot.lane.b32.xlu0 %v446, 28
        %v488 = vpop.permute.xlu0 %487
        %489 = vrot.lane.b32.xlu0 %v448, 28
        %v490 = vpop.permute.xlu0 %489
        %491 = vrot.lane.b32.xlu0 %v450, 28
        %v492 = vpop.permute.xlu0 %491
        %493 = vrot.lane.b32.xlu0 %v452, 28
        %v494 = vpop.permute.xlu0 %493
        %495 = vrot.lane.b32.xlu0 %v454, 28
        %v496 = vpop.permute.xlu0 %495
        %497 = vrot.lane.b32.xlu0 %v456, 28
        %v498 = vpop.permute.xlu0 %497
        %499 = vrot.lane.b32.xlu0 %v458, 28
        %v500 = vpop.permute.xlu0 %499
        %501 = vrot.lane.b32.xlu0 %v460, 28
        %v502 = vpop.permute.xlu0 %501
        %503 = vrot.lane.b32.xlu0 %v462, 28
        %v504 = vpop.permute.xlu0 %503
        %505 = vrot.lane.b32.xlu0 %v464, 28
        %v506 = vpop.permute.xlu0 %505
        %507 = vrot.lane.b32.xlu0 %v466, 28
        %v508 = vpop.permute.xlu0 %507
        %533 = vrot.lane.b32.xlu0 %v422, 56
        %v534 = vpop.permute.xlu0 %533
        %535 = vrot.lane.b32.xlu0 %v424, 56
        %v536 = vpop.permute.xlu0 %535
        %537 = vrot.lane.b32.xlu0 %v426, 56
        %v538 = vpop.permute.xlu0 %537
        %539 = vrot.lane.b32.xlu0 %v428, 56
        %v540 = vpop.permute.xlu0 %539
        %541 = vrot.lane.b32.xlu0 %v430, 56
        %v542 = vpop.permute.xlu0 %541
        %543 = vrot.lane.b32.xlu0 %v432, 56
        %v544 = vpop.permute.xlu0 %543
        %545 = vrot.lane.b32.xlu0 %v434, 56
        %v546 = vpop.permute.xlu0 %545
        %547 = vrot.lane.b32.xlu0 %v436, 56
        %v548 = vpop.permute.xlu0 %547
        %549 = vrot.lane.b32.xlu0 %v438, 56
        %v550 = vpop.permute.xlu0 %549
        %551 = vrot.lane.b32.xlu0 %v440, 56
        %v552 = vpop.permute.xlu0 %551
        %553 = vrot.lane.b32.xlu0 %v442, 56
        %v554 = vpop.permute.xlu0 %553
        %555 = vrot.lane.b32.xlu0 %v468, 56
        %v556 = vpop.permute.xlu0 %555
        %570 = vrot.lane.b32.xlu0 %v446, 84
        %v571 = vpop.permute.xlu0 %570
        %572 = vrot.lane.b32.xlu0 %v448, 84
        %v573 = vpop.permute.xlu0 %572
        %574 = vrot.lane.b32.xlu0 %v450, 84
        %v575 = vpop.permute.xlu0 %574
        %576 = vrot.lane.b32.xlu0 %v452, 84
        %v577 = vpop.permute.xlu0 %576
        %578 = vrot.lane.b32.xlu0 %v454, 84
        %v579 = vpop.permute.xlu0 %578
        %580 = vrot.lane.b32.xlu0 %v456, 84
        %v581 = vpop.permute.xlu0 %580
        %582 = vrot.lane.b32.xlu0 %v458, 84
        %v583 = vpop.permute.xlu0 %582
        %584 = vrot.lane.b32.xlu0 %v460, 84
        %v585 = vpop.permute.xlu0 %584
        %586 = vrot.lane.b32.xlu0 %v462, 84
        %v587 = vpop.permute.xlu0 %586
        %588 = vrot.lane.b32.xlu0 %v464, 84
        %v589 = vpop.permute.xlu0 %588
        %590 = vrot.lane.b32.xlu0 %v466, 84
        %v591 = vpop.permute.xlu0 %590
        %592 = vrot.lane.b32.xlu0 %v470, 84
        %v593 = vpop.permute.xlu0 %592
        %607 = vrot.lane.b32.xlu0 %v424, 112
        %v608 = vpop.permute.xlu0 %607
        %609 = vrot.lane.b32.xlu0 %v426, 112
        %v610 = vpop.permute.xlu0 %609
        %611 = vrot.lane.b32.xlu0 %v428, 112
        %v612 = vpop.permute.xlu0 %611
        %613 = vrot.lane.b32.xlu0 %v430, 112
        %v614 = vpop.permute.xlu0 %613
        %615 = vrot.lane.b32.xlu0 %v432, 112
        %v616 = vpop.permute.xlu0 %615
        %617 = vrot.lane.b32.xlu0 %v434, 112
        %v618 = vpop.permute.xlu0 %617
        %619 = vrot.lane.b32.xlu0 %v436, 112
        %v620 = vpop.permute.xlu0 %619
        %621 = vrot.lane.b32.xlu0 %v438, 112
        %v622 = vpop.permute.xlu0 %621
        %623 = vrot.lane.b32.xlu0 %v440, 112
        %v624 = vpop.permute.xlu0 %623
        %625 = vrot.lane.b32.xlu0 %v442, 112
        %v626 = vpop.permute.xlu0 %625
        %627 = vrot.lane.b32.xlu0 %v468, 112
        %v628 = vpop.permute.xlu0 %627
        %629 = vrot.lane.b32.xlu0 %v472, 112
        %v630 = vpop.permute.xlu0 %629
        %vm643 = vcmask 228352
        %v644 = vsel %vm643, %v420, %v486
        %v645 = vsel %vm643, %v422, %v488
        %v646 = vsel %vm643, %v424, %v490
        %v647 = vsel %vm643, %v426, %v492
        %v648 = vsel %vm643, %v428, %v494
        %v649 = vsel %vm643, %v430, %v496
        %v650 = vsel %vm643, %v432, %v498
        %v651 = vsel %vm643, %v434, %v500
        %v652 = vsel %vm643, %v436, %v502
        %v653 = vsel %vm643, %v438, %v504
        %v654 = vsel %vm643, %v440, %v506
        %v655 = vsel %vm643, %v442, %v508
        %vm656 = vcmask 457728
        %v657 = vsel %vm656, %v644, %v534
        %v658 = vsel %vm656, %v645, %v536
        %v659 = vsel %vm656, %v646, %v538
        %v660 = vsel %vm656, %v647, %v540
        %v661 = vsel %vm656, %v648, %v542
        %v662 = vsel %vm656, %v649, %v544
        %v663 = vsel %vm656, %v650, %v546
        %v664 = vsel %vm656, %v651, %v548
        %v665 = vsel %vm656, %v652, %v550
        %v666 = vsel %vm656, %v653, %v552
        %v667 = vsel %vm656, %v654, %v554
        %v668 = vsel %vm656, %v655, %v556
        %vm669 = vcmask 687104
        %v670 = vsel %vm669, %v657, %v571
        %v671 = vsel %vm669, %v658, %v573
        %v672 = vsel %vm669, %v659, %v575
        %v673 = vsel %vm669, %v660, %v577
        %v674 = vsel %vm669, %v661, %v579
        %v675 = vsel %vm669, %v662, %v581
        %v676 = vsel %vm669, %v663, %v583
        %v677 = vsel %vm669, %v664, %v585
        %v678 = vsel %vm669, %v665, %v587
        %v679 = vsel %vm669, %v666, %v589
        %v680 = vsel %vm669, %v667, %v591
        %v681 = vsel %vm669, %v668, %v593
        %vm682 = vcmask 916480
        %v683 = vsel %vm682, %v670, %v608
        %v684 = vsel %vm682, %v671, %v610
        %v685 = vsel %vm682, %v672, %v612
        %v686 = vsel %vm682, %v673, %v614
        %v687 = vsel %vm682, %v674, %v616
        %v688 = vsel %vm682, %v675, %v618
        %v689 = vsel %vm682, %v676, %v620
        %v690 = vsel %vm682, %v677, %v622
        %v691 = vsel %vm682, %v678, %v624
        %v692 = vsel %vm682, %v679, %v626
        %v693 = vsel %vm682, %v680, %v628
        %v694 = vsel %vm682, %v681, %v630
        %v695 = vpack.c.bf16 %v684, %v683
        %v696 = vpack.c.bf16 %v610, %v608
        %v697 = vpack.c.bf16 %v686, %v685
        %v698 = vpack.c.bf16 %v614, %v612
        %v699 = vpack.c.bf16 %v688, %v687
        %v700 = vpack.c.bf16 %v618, %v616
        %v701 = vpack.c.bf16 %v690, %v689
        %v702 = vpack.c.bf16 %v622, %v620
        %v703 = vpack.c.bf16 %v692, %v691
        %v704 = vpack.c.bf16 %v626, %v624
        %v705 = vpack.c.bf16 %v694, %v693
        %v706 = vpack.c.bf16 %v630, %v628
        %v707 = vld [vmem:[%s1] sm:$0xf]
        %v708 = vld [vmem:[%s1 + $0x4] sm:$0xf]
        %v709 = vld [vmem:[%s1 + $0x8] sm:$0xf]
        %v710 = vld [vmem:[%s1 + $0xc] sm:$0xf]
        %v711 = vld [vmem:[%s1 + $0x10] sm:$0xf]
        %v712 = vld [vmem:[%s1 + $0x14] sm:$0xf]
        %v713 = vld [vmem:[%s1 + $0x18] sm:$0xf]
        %v714 = vld [vmem:[%s1 + $0x1c] sm:$0xf]
        %v715 = vld [vmem:[%s1 + $0x20] sm:$0xf]
        %v716 = vld [vmem:[%s1 + $0x24] sm:$0xf]
        %v717 = vld [vmem:[%s1 + $0x28] sm:$0xf]
        %v718 = vld [vmem:[%s1 + $0x2c] sm:$0xf]
        %v719 = vld [vmem:[%s1 + $0x30] sm:$0xf]
        %v720 = vld [vmem:[%s1 + $0x34] sm:$0xf]
        %v721 = vld [vmem:[%s1 + $0x38] sm:$0xf]
        %v722 = vld [vmem:[%s1 + $0x3c] sm:$0xf]
        %v723 = vld [vmem:[%s1 + $0x40] sm:$0xf]
        %v724 = vld [vmem:[%s1 + $0x44] sm:$0x3]
        %v725 = vld [vmem:[%s2] sm:$0x1]
        %v727 = vlaneseq
        %v728 = vshrl.u32 %v727, 7
        %v729 = vsub.s32 0, %v728
        %v730 = vrot.slane %v725, %v729
        %v750 = vunpack.c.l.b16 %v707
        %v751 = vunpack.c.l.b16 %v708
        %v752 = vunpack.c.l.b16 %v709
        %v753 = vunpack.c.l.b16 %v710
        %v754 = vunpack.c.l.b16 %v711
        %v755 = vunpack.c.l.b16 %v712
        %v756 = vunpack.c.l.b16 %v713
        %v757 = vunpack.c.l.b16 %v714
        %v758 = vunpack.c.l.b16 %v715
        %v759 = vunpack.c.l.b16 %v716
        %v760 = vunpack.c.l.b16 %v717
        %v761 = vunpack.c.l.b16 %v718
        %v762 = vunpack.c.l.b16 %v719
        %v763 = vunpack.c.l.b16 %v720
        %v764 = vunpack.c.l.b16 %v721
        %v765 = vunpack.c.l.b16 %v722
        %v766 = vunpack.c.l.b16 %v723
        %v767 = vunpack.c.l.b16 %v724
        %v768 = vpack.c.b16 %v751, %v750
        %v769 = vpack.c.b16 %v753, %v752
        %v770 = vpack.c.b16 %v755, %v754
        %v771 = vpack.c.b16 %v757, %v756
        %v772 = vpack.c.b16 %v759, %v758
        %v773 = vpack.c.b16 %v761, %v760
        %v774 = vpack.c.b16 %v763, %v762
        %v775 = vpack.c.b16 %v765, %v764
        %v776 = vpack.c.b16 %v767, %v766
        %vm785 = vcmask 97280
        %v787 = vsel %vm785, %v696, 0
        %v790 = vsel %vm785, %v698, 0
        %v793 = vsel %vm785, %v700, 0
        %v796 = vsel %vm785, %v702, 0
        %v799 = vsel %vm785, %v704, 0
        %v802 = vsel %vm785, %v706, 0
        %vm804 = vcmask 1045504
        %v806 = vsel %vm804, %v776, 0
        %808 = vmatprep.subr.bf16.mxu0 0
        %809 = vmatpush1.bf16.msra.mxu0 %v768
        %810 = vmatprep.subr.bf16.mxu0 0
        %811 = vmatpush1.bf16.msra.mxu0 %v769
        %812 = vmatprep.subr.bf16.mxu0 0
        %813 = vmatpush1.bf16.msra.mxu0 %v770
        %814 = vmatprep.subr.bf16.mxu0 0
        %815 = vmatpush1.bf16.msra.mxu0 %v771
        %816 = vmatprep.subr.bf16.mxu0 0
        %817 = vmatpush1.bf16.msra.mxu0 %v772
        %818 = vmatprep.subr.bf16.mxu0 0
        %819 = vmatpush1.bf16.msra.mxu0 %v773
        %820 = vmatprep.subr.bf16.mxu0 0
        %821 = vmatpush1.bf16.msra.mxu0 %v774
        %822 = vmatprep.subr.bf16.mxu0 0
        %823 = vmatpush1.bf16.msra.mxu0 %v775
        %824 = vmatprep.subr.bf16.mxu0 0
        %825 = vmatpush1.bf16.msra.mxu0 %v806
        %826 = vmatprep.subr.bf16.mxu0 0
        %827 = vmatpush1.bf16.msra.mxu0 0
        %828 = vmatprep.subr.bf16.mxu0 0
        %829 = vmatpush1.bf16.msra.mxu0 0
        %830 = vmatprep.subr.bf16.mxu0 0
        %831 = vmatpush1.bf16.msra.mxu0 0
        %832 = vmatprep.subr.bf16.mxu0 0
        %833 = vmatpush1.bf16.msra.mxu0 0
        %834 = vmatprep.subr.bf16.mxu0 0
        %835 = vmatpush1.bf16.msra.mxu0 0
        %836 = vmatprep.subr.bf16.mxu0 0
        %837 = vmatpush1.bf16.msra.mxu0 0
        %838 = vmatprep.subr.bf16.mxu0 0
        %839 = vmatpush1.bf16.msra.mxu0 0
        %840 = vmatprep.mubr.bf16.mxu0 %v787
        %841 = vmatmul.mubr.bf16.gmra.mrb[0].mxu0 %v695
        %v842 = vpop.f32.mrb[0].mxu0
        %v843 = vadd.f32 %v730, %v842
        %v844 = vpop.f32.mrb[0].mxu0
        %v845 = vpop.f32.mrb[0].mxu0
        %v846 = vadd.f32 %v730, %v845
        %v847 = vpop.f32.mrb[0].mxu0
        %848 = vmatprep.mubr.bf16.mxu0 %v790
        %849 = vmatmul.mubr.bf16.gmra.mrb[0].mxu0 %v697
        %v850 = vpop.f32.mrb[0].mxu0
        %v851 = vadd.f32 %v730, %v850
        %v852 = vpop.f32.mrb[0].mxu0
        %v853 = vpop.f32.mrb[0].mxu0
        %v854 = vadd.f32 %v730, %v853
        %v855 = vpop.f32.mrb[0].mxu0
        %856 = vmatprep.mubr.bf16.mxu0 %v793
        %857 = vmatmul.mubr.bf16.gmra.mrb[0].mxu0 %v699
        %v858 = vpop.f32.mrb[0].mxu0
        %v859 = vadd.f32 %v730, %v858
        %v860 = vpop.f32.mrb[0].mxu0
        %v861 = vpop.f32.mrb[0].mxu0
        %v862 = vadd.f32 %v730, %v861
        %v863 = vpop.f32.mrb[0].mxu0
        %864 = vmatprep.mubr.bf16.mxu0 %v796
        %865 = vmatmul.mubr.bf16.gmra.mrb[0].mxu0 %v701
        %v866 = vpop.f32.mrb[0].mxu0
        %v867 = vadd.f32 %v730, %v866
        %v868 = vpop.f32.mrb[0].mxu0
        %v869 = vpop.f32.mrb[0].mxu0
        %v870 = vadd.f32 %v730, %v869
        %v871 = vpop.f32.mrb[0].mxu0
        %872 = vmatprep.mubr.bf16.mxu0 %v799
        %873 = vmatmul.mubr.bf16.gmra.mrb[0].mxu0 %v703
        %v874 = vpop.f32.mrb[0].mxu0
        %v875 = vadd.f32 %v730, %v874
        %v876 = vpop.f32.mrb[0].mxu0
        %v877 = vpop.f32.mrb[0].mxu0
        %v878 = vadd.f32 %v730, %v877
        %v879 = vpop.f32.mrb[0].mxu0
        %880 = vmatprep.mubr.bf16.mxu0 %v802
        %881 = vmatmul.mubr.bf16.gmra.mrb[0].mxu0 %v705
        %v882 = vpop.f32.mrb[0].mxu0
        %v883 = vadd.f32 %v730, %v882
        %v884 = vpop.f32.mrb[0].mxu0
        %v885 = vpop.f32.mrb[0].mxu0
        %v886 = vpop.f32.mrb[0].mxu0
        %887 = vdwg.mxu0
        %v888 = vmax.f32 %v843, 0.0
        %v889 = vmax.f32 %v846, 0.0
        %v890 = vmax.f32 %v851, 0.0
        %v891 = vmax.f32 %v854, 0.0
        %v892 = vmax.f32 %v859, 0.0
        %v893 = vmax.f32 %v862, 0.0
        %v894 = vmax.f32 %v867, 0.0
        %v895 = vmax.f32 %v870, 0.0
        %v896 = vmax.f32 %v875, 0.0
        %v897 = vmax.f32 %v878, 0.0
        %v898 = vmax.f32 %v883, 0.0
        %904 = vrot.lane.b32.xlu0 %v889, 48
        %v905 = vpop.permute.xlu0 %904
        %906 = vrot.lane.b32.xlu0 %v891, 48
        %v907 = vpop.permute.xlu0 %906
        %908 = vrot.lane.b32.xlu0 %v893, 48
        %v909 = vpop.permute.xlu0 %908
        %910 = vrot.lane.b32.xlu0 %v895, 48
        %v911 = vpop.permute.xlu0 %910
        %912 = vrot.lane.b32.xlu0 %v897, 48
        %v913 = vpop.permute.xlu0 %912
        %924 = vrot.lane.b32.xlu0 %v890, 96
        %v925 = vpop.permute.xlu0 %924
        %926 = vrot.lane.b32.xlu0 %v892, 96
        %v927 = vpop.permute.xlu0 %926
        %928 = vrot.lane.b32.xlu0 %v894, 96
        %v929 = vpop.permute.xlu0 %928
        %930 = vrot.lane.b32.xlu0 %v896, 96
        %v931 = vpop.permute.xlu0 %930
        %932 = vrot.lane.b32.xlu0 %v898, 96
        %v933 = vpop.permute.xlu0 %932
        %vm939 = vcmask 392192
        %v940 = vsel %vm939, %v888, %v905
        %v941 = vsel %vm939, %v890, %v907
        %v942 = vsel %vm939, %v892, %v909
        %v943 = vsel %vm939, %v894, %v911
        %v944 = vsel %vm939, %v896, %v913
        %vm945 = vcmask 785408
        %v946 = vsel %vm945, %v940, %v925
        %v947 = vsel %vm945, %v941, %v927
        %v948 = vsel %vm945, %v942, %v929
        %v949 = vsel %vm945, %v943, %v931
        %v950 = vsel %vm945, %v944, %v933
        %v951 = vpack.c.bf16 %v947, %v946
        %v952 = vpack.c.bf16 %v927, %v925
        %v953 = vpack.c.bf16 %v949, %v948
        %v954 = vpack.c.bf16 %v931, %v929
        %v955 = vpack.c.bf16 %v950, %v950
        %v956 = vpack.c.bf16 %v933, %v933
        %v957 = vld [vmem:[%s3] sm:$0xf]
        %v958 = vld [vmem:[%s3 + $0x4] sm:$0xf]
        %v959 = vld [vmem:[%s3 + $0x8] sm:$0xf]
        %v960 = vld [vmem:[%s3 + $0xc] sm:$0xf]
        %v961 = vld [vmem:[%s3 + $0x10] sm:$0xf]
        %v962 = vld [vmem:[%s3 + $0x14] sm:$0xf]
        %v963 = vld [vmem:[%s3 + $0x18] sm:$0xf]
        %v964 = vld [vmem:[%s3 + $0x1c] sm:$0xf]
        %v965 = vld [vmem:[%s3 + $0x20] sm:$0xf]
        %v966 = vld [vmem:[%s3 + $0x24] sm:$0xf]
        %v967 = vld [vmem:[%s3 + $0x28] sm:$0xf]
        %v968 = vld [vmem:[%s3 + $0x2c] sm:$0xf]
        %v969 = vld [vmem:[%s3 + $0x30] sm:$0xf]
        %v970 = vld [vmem:[%s3 + $0x34] sm:$0xf]
        %v971 = vld [vmem:[%s3 + $0x38] sm:$0xf]
        %v972 = vld [vmem:[%s3 + $0x3c] sm:$0xf]
        %v973 = vld [vmem:[%s3 + $0x40] sm:$0xf]
        %v974 = vld [vmem:[%s3 + $0x44] sm:$0xf]
        %v975 = vld [vmem:[%s4] sm:$0x1]
        %v977 = vlaneseq
        %v978 = vshrl.u32 %v977, 7
        %v979 = vsub.s32 0, %v978
        %v980 = vrot.slane %v975, %v979
        %v1000 = vunpack.c.l.b16 %v957
        %v1001 = vunpack.c.l.b16 %v958
        %v1002 = vunpack.c.l.b16 %v959
        %v1003 = vunpack.c.l.b16 %v960
        %v1004 = vunpack.c.l.b16 %v961
        %v1005 = vunpack.c.l.b16 %v962
        %v1006 = vunpack.c.l.b16 %v963
        %v1007 = vunpack.c.l.b16 %v964
        %v1008 = vunpack.c.l.b16 %v965
        %v1009 = vunpack.c.l.b16 %v966
        %v1010 = vunpack.c.l.b16 %v967
        %v1011 = vunpack.c.l.b16 %v968
        %v1012 = vunpack.c.l.b16 %v969
        %v1013 = vunpack.c.l.b16 %v970
        %v1014 = vunpack.c.l.b16 %v971
        %v1015 = vunpack.c.l.b16 %v972
        %v1016 = vunpack.c.l.b16 %v973
        %v1017 = vunpack.c.l.b16 %v974
        %v1018 = vpack.c.b16 %v1001, %v1000
        %v1019 = vpack.c.b16 %v1003, %v1002
        %v1020 = vpack.c.b16 %v1005, %v1004
        %v1021 = vpack.c.b16 %v1007, %v1006
        %v1022 = vpack.c.b16 %v1009, %v1008
        %v1023 = vpack.c.b16 %v1011, %v1010
        %v1024 = vpack.c.b16 %v1013, %v1012
        %v1025 = vpack.c.b16 %v1015, %v1014
        %v1026 = vpack.c.b16 %v1017, %v1016
        %vm1036 = vcmask 130048
        %v1038 = vsel %vm1036, %v952, 0
        %v1041 = vsel %vm1036, %v954, 0
        %v1044 = vsel %vm1036, %v956, 0
        %1046 = vmatprep.subr.bf16.mxu0 0
        %1047 = vmatpush1.bf16.msra.mxu0 %v1018
        %1048 = vmatprep.subr.bf16.mxu0 0
        %1049 = vmatpush1.bf16.msra.mxu0 %v1019
        %1050 = vmatprep.subr.bf16.mxu0 0
        %1051 = vmatpush1.bf16.msra.mxu0 %v1020
        %1052 = vmatprep.subr.bf16.mxu0 0
        %1053 = vmatpush1.bf16.msra.mxu0 %v1021
        %1054 = vmatprep.subr.bf16.mxu0 0
        %1055 = vmatpush1.bf16.msra.mxu0 %v1022
        %1056 = vmatprep.subr.bf16.mxu0 0
        %1057 = vmatpush1.bf16.msra.mxu0 %v1023
        %1058 = vmatprep.subr.bf16.mxu0 0
        %1059 = vmatpush1.bf16.msra.mxu0 %v1024
        %1060 = vmatprep.subr.bf16.mxu0 0
        %1061 = vmatpush1.bf16.msra.mxu0 %v1025
        %1062 = vmatprep.subr.bf16.mxu0 0
        %1063 = vmatpush1.bf16.msra.mxu0 %v1026
        %1064 = vmatprep.subr.bf16.mxu0 0
        %1065 = vmatpush1.bf16.msra.mxu0 0
        %1066 = vmatprep.subr.bf16.mxu0 0
        %1067 = vmatpush1.bf16.msra.mxu0 0
        %1068 = vmatprep.subr.bf16.mxu0 0
        %1069 = vmatpush1.bf16.msra.mxu0 0
        %1070 = vmatprep.subr.bf16.mxu0 0
        %1071 = vmatpush1.bf16.msra.mxu0 0
        %1072 = vmatprep.subr.bf16.mxu0 0
        %1073 = vmatpush1.bf16.msra.mxu0 0
        %1074 = vmatprep.subr.bf16.mxu0 0
        %1075 = vmatpush1.bf16.msra.mxu0 0
        %1076 = vmatprep.subr.bf16.mxu0 0
        %1077 = vmatpush1.bf16.msra.mxu0 0
        %1078 = vmatprep.mubr.bf16.mxu0 %v1038
        %1079 = vmatmul.mubr.bf16.gmra.mrb[0].mxu0 %v951
        %v1080 = vpop.f32.mrb[0].mxu0
        %v1081 = vadd.f32 %v980, %v1080
        %v1082 = vpop.f32.mrb[0].mxu0
        %v1083 = vpop.f32.mrb[0].mxu0
        %v1084 = vadd.f32 %v980, %v1083
        %v1085 = vpop.f32.mrb[0].mxu0
        %1086 = vmatprep.mubr.bf16.mxu0 %v1041
        %1087 = vmatmul.mubr.bf16.gmra.mrb[0].mxu0 %v953
        %v1088 = vpop.f32.mrb[0].mxu0
        %v1089 = vadd.f32 %v980, %v1088
        %v1090 = vpop.f32.mrb[0].mxu0
        %v1091 = vpop.f32.mrb[0].mxu0
        %v1092 = vadd.f32 %v980, %v1091
        %v1093 = vpop.f32.mrb[0].mxu0
        %1094 = vmatprep.mubr.bf16.mxu0 %v1044
        %1095 = vmatmul.mubr.bf16.gmra.mrb[0].mxu0 %v955
        %v1096 = vpop.f32.mrb[0].mxu0
        %v1097 = vadd.f32 %v980, %v1096
        %v1098 = vpop.f32.mrb[0].mxu0
        %v1099 = vpop.f32.mrb[0].mxu0
        %v1100 = vpop.f32.mrb[0].mxu0
        %1101 = vdwg.mxu0
        %v1102 = vmax.f32 %v1081, 0.0
        %v1103 = vmax.f32 %v1084, 0.0
        %v1104 = vmax.f32 %v1089, 0.0
        %v1105 = vmax.f32 %v1092, 0.0
        %v1106 = vmax.f32 %v1097, 0.0
        %1108 = vrot.lane.b32.xlu0 %v1103, 40
        %v1109 = vpop.permute.xlu0 %1108
        %1112 = vrot.lane.b32.xlu0 %v1104, 80
        %v1113 = vpop.permute.xlu0 %1112
        %1116 = vrot.lane.b32.xlu0 %v1105, 120
        %v1117 = vpop.permute.xlu0 %1116
        %1120 = vrot.lane.b32.xlu0 %v1106, 32
        %v1121 = vpop.permute.xlu0 %1120
        %vm1123 = vcmask 326656
        %v1124 = vsel %vm1123, %v1102, %v1109
        %vm1125 = vcmask 654336
        %v1126 = vsel %vm1125, %v1124, %v1113
        %vm1127 = vcmask 982016
        %v1128 = vsel %vm1127, %v1126, %v1117
        %vm1129 = vcmask 261120
        %v1130 = vsel %vm1129, %v1117, %v1121
        %v1131 = vpack.c.bf16 %v1128, %v1128
        %v1132 = vpack.c.bf16 %v1130, %v1130
        %v1133 = vld [vmem:[%s5] sm:$0xf]
        %v1134 = vld [vmem:[%s5 + $0x4] sm:$0xf]
        %v1135 = vld [vmem:[%s5 + $0x8] sm:$0xf]
        %v1136 = vld [vmem:[%s5 + $0xc] sm:$0xf]
        %v1137 = vld [vmem:[%s5 + $0x10] sm:$0xf]
        %v1138 = vld [vmem:[%s5 + $0x14] sm:$0xf]
        %v1139 = vld [vmem:[%s5 + $0x18] sm:$0xf]
        %v1140 = vld [vmem:[%s5 + $0x1c] sm:$0xf]
        %v1141 = vld [vmem:[%s5 + $0x20] sm:$0xf]
        %v1142 = vld [vmem:[%s5 + $0x24] sm:$0xf]
        %v1143 = vld [vmem:[%s5 + $0x28] sm:$0xf]
        %v1144 = vld [vmem:[%s5 + $0x2c] sm:$0xf]
        %v1145 = vld [vmem:[%s5 + $0x30] sm:$0xf]
        %v1146 = vld [vmem:[%s5 + $0x34] sm:$0xf]
        %v1147 = vld [vmem:[%s5 + $0x38] sm:$0xf]
        %v1148 = vld [vmem:[%s5 + $0x3c] sm:$0xf]
        %v1149 = vld [vmem:[%s5 + $0x40] sm:$0xf]
        %v1150 = vld [vmem:[%s5 + $0x44] sm:$0xf]
        %v1151 = vld [vmem:[%s5 + $0x48] sm:$0xf]
        %v1152 = vld [vmem:[%s5 + $0x4c] sm:$0xf]
        %v1153 = vld [vmem:[%s5 + $0x50] sm:$0xf]
        %v1154 = vld [vmem:[%s5 + $0x54] sm:$0xf]
        %v1155 = vld [vmem:[%s5 + $0x58] sm:$0xf]
        %v1156 = vld [vmem:[%s5 + $0x5c] sm:$0xf]
        %v1157 = vld [vmem:[%s5 + $0x60] sm:$0xf]
        %v1158 = vld [vmem:[%s6] sm:$0x1]
        %v1160 = vlaneseq
        %v1161 = vshrl.u32 %v1160, 7
        %v1162 = vsub.s32 0, %v1161
        %v1163 = vrot.slane %v1158, %v1162
        %v1190 = vunpack.c.l.b16 %v1133
        %v1191 = vunpack.c.l.b16 %v1134
        %v1192 = vunpack.c.l.b16 %v1135
        %v1193 = vunpack.c.l.b16 %v1136
        %v1194 = vunpack.c.l.b16 %v1137
        %v1195 = vunpack.c.l.b16 %v1138
        %v1196 = vunpack.c.l.b16 %v1139
        %v1197 = vunpack.c.l.b16 %v1140
        %v1198 = vunpack.c.l.b16 %v1141
        %v1199 = vunpack.c.l.b16 %v1142
        %v1200 = vunpack.c.l.b16 %v1143
        %v1201 = vunpack.c.l.b16 %v1144
        %v1202 = vunpack.c.l.b16 %v1145
        %v1203 = vunpack.c.l.b16 %v1146
        %v1204 = vunpack.c.l.b16 %v1147
        %v1205 = vunpack.c.l.b16 %v1148
        %v1206 = vunpack.c.l.b16 %v1149
        %v1207 = vunpack.c.l.b16 %v1150
        %v1208 = vunpack.c.l.b16 %v1151
        %v1209 = vunpack.c.l.b16 %v1152
        %v1210 = vunpack.c.l.b16 %v1153
        %v1211 = vunpack.c.l.b16 %v1154
        %v1212 = vunpack.c.l.b16 %v1155
        %v1213 = vunpack.c.l.b16 %v1156
        %v1214 = vunpack.c.l.b16 %v1157
        %v1215 = vpack.c.b16 %v1191, %v1190
        %v1216 = vpack.c.b16 %v1193, %v1192
        %v1217 = vpack.c.b16 %v1195, %v1194
        %v1218 = vpack.c.b16 %v1197, %v1196
        %v1219 = vpack.c.b16 %v1199, %v1198
        %v1220 = vpack.c.b16 %v1201, %v1200
        %v1221 = vpack.c.b16 %v1203, %v1202
        %v1222 = vpack.c.b16 %v1205, %v1204
        %v1223 = vpack.c.b16 %v1207, %v1206
        %v1224 = vpack.c.b16 %v1209, %v1208
        %v1225 = vpack.c.b16 %v1211, %v1210
        %v1226 = vpack.c.b16 %v1213, %v1212
        %v1227 = vpack.c.b16 %v1214, %v1214
        %vm1240 = vcmask 588800
        %v1242 = vsel %vm1240, %v1132, 0
        %vm1244 = vcmask 1043456
        %v1246 = vsel %vm1244, %v1227, 0
        %1248 = vmatprep.subr.bf16.mxu0 0
        %1249 = vmatpush1.bf16.msra.mxu0 %v1215
        %1250 = vmatprep.subr.bf16.mxu0 0
        %1251 = vmatpush1.bf16.msra.mxu0 %v1216
        %1252 = vmatprep.subr.bf16.mxu0 0
        %1253 = vmatpush1.bf16.msra.mxu0 %v1217
        %1254 = vmatprep.subr.bf16.mxu0 0
        %1255 = vmatpush1.bf16.msra.mxu0 %v1218
        %1256 = vmatprep.subr.bf16.mxu0 0
        %1257 = vmatpush1.bf16.msra.mxu0 %v1219
        %1258 = vmatprep.subr.bf16.mxu0 0
        %1259 = vmatpush1.bf16.msra.mxu0 %v1220
        %1260 = vmatprep.subr.bf16.mxu0 0
        %1261 = vmatpush1.bf16.msra.mxu0 %v1221
        %1262 = vmatprep.subr.bf16.mxu0 0
        %1263 = vmatpush1.bf16.msra.mxu0 %v1222
        %1264 = vmatprep.subr.bf16.mxu0 0
        %1265 = vmatpush1.bf16.msra.mxu0 %v1223
        %1266 = vmatprep.subr.bf16.mxu0 0
        %1267 = vmatpush1.bf16.msra.mxu0 %v1224
        %1268 = vmatprep.subr.bf16.mxu0 0
        %1269 = vmatpush1.bf16.msra.mxu0 %v1225
        %1270 = vmatprep.subr.bf16.mxu0 0
        %1271 = vmatpush1.bf16.msra.mxu0 %v1226
        %1272 = vmatprep.subr.bf16.mxu0 0
        %1273 = vmatpush1.bf16.msra.mxu0 %v1246
        %1274 = vmatprep.subr.bf16.mxu0 0
        %1275 = vmatpush1.bf16.msra.mxu0 0
        %1276 = vmatprep.subr.bf16.mxu0 0
        %1277 = vmatpush1.bf16.msra.mxu0 0
        %1278 = vmatprep.subr.bf16.mxu0 0
        %1279 = vmatpush1.bf16.msra.mxu0 0
        %1280 = vmatprep.mubr.bf16.mxu0 %v1242
        %1281 = vmatmul.mubr.bf16.gmra.mrb[0].mxu0 %v1131
        %v1282 = vpop.f32.mrb[0].mxu0
        %v1283 = vadd.f32 %v1163, %v1282
        %v1284 = vpop.f32.mrb[0].mxu0
        %v1285 = vpop.f32.mrb[0].mxu0
        %v1286 = vpop.f32.mrb[0].mxu0
        %1287 = vdwg.mxu0
        %1288 = vst [vmem:[%s418] sm:$0xff] %v1283
        %s1289 = sand.u32 %s181, 1
        %s1290 = scalar_lea.sflag [#allocation4], %s1289
        %s1291 = sand.u32 %s181, 1
        %s1292 = smul.addr %s1291, 8
        %s1293 = scalar_lea.vmem [#allocation3], %s1292
        // Predicated region
        $region87: #{simple_cnn_forward.1} parent=81 // pred_check
          %p1294 = pneg %p191
        $region88: #{simple_cnn_forward.1} parent=81 // pred_check_branch
          %1296 = sbr.rel (%p1294) target = $region90
        $region89: #{simple_cnn_forward.1} parent=81 // pred_region
          %s1298 = ssub.s32 128, 128
          %1299 = vsyncadd %s1290, %s1298
          %s1300 = smul.addr %s21, 128
          %s1301 = scalar_lea.hbm %s7, %s1300
          %s1303 = sshll.u32 %s1293, 4
          %s1304 = int_to_ptr.vmem [resolvable:$true] %s1303
          %1306 = dma.vmem_to_hbm [thread:$0]  %s1304, 128, %s1301, %s1290
        $region90: #{simple_cnn_forward.1} parent=81 // pred_fallthru
          _
      $region82: #{simple_cnn_forward.1} parent=5 // pred_fallthru
        _
      %p1307 = scmp.le.s32.totalorder 2, %s16
      // Predicated region
      $region91: #{simple_cnn_forward.1} parent=5 // pred_check
        %p1308 = pneg %p1307
      $region92: #{simple_cnn_forward.1} parent=5 // pred_check_branch
        %1310 = sbr.rel (%p1308) target = $region94
      $region93: #{simple_cnn_forward.1} parent=5 // pred_region
        %s1311 = ssub.s32 %s16, 2
        // Predicated region
        $region95: #{simple_cnn_forward.1} parent=93 // pred_check
          %p1312 = pneg %p197
        $region96: #{simple_cnn_forward.1} parent=93 // pred_check_branch
          %1314 = sbr.rel (%p1312) target = $region98
        $region97: #{simple_cnn_forward.1} parent=93 // pred_region
          %s1315 = sand.u32 %s182, 1
          %s1316 = scalar_lea.sflag [#allocation4], %s1315
          %s1317 = sand.u32 %s182, 1
          %s1318 = smul.addr %s1317, 8
          %s1319 = scalar_lea.vmem [#allocation3], %s1318
          %1320 = dma.done %s1316, 128
        $region98: #{simple_cnn_forward.1} parent=93 // pred_fallthru
          _
      $region94: #{simple_cnn_forward.1} parent=5 // pred_fallthru
        _
    $region6: #{simple_cnn_forward.1} parent=1 // loop_footer
      %s20 = sadd.s32 1, %s16
    $region7: #{simple_cnn_forward.1} parent=1 // loop_footer_branch
      %15 = sbr.rel target = $region3
    $region8: #{simple_cnn_forward.1} parent=1 // loop_exit
      _
    %1321 = vsyncpa [#allocation4], 1
    %s1322 = scalar_lea.sflag [#allocation4], 1
    %1323 = vsyncpa %s1322, 1

</llo_original>
